<compile_context>
chip_gen: v6e
topology: v6e:2x2x1
jax: 0.10.0
libtpu: 0.0.40
codegen_flags: <defaults>
</compile_context>

<pallas_src>
import functools

import jax
import jax.numpy as jnp
from jax import lax
from jax.experimental import pallas as pl
from jax.experimental.pallas import tpu as pltpu

# Hyperparameters from GWBaseModel._set_param defaults
GROMOV_ITERS = 15
PSINKHORN_ITERS = 15
PSINKHORN_TAU = 0.1
INV_TAU = 1.0 / PSINKHORN_TAU
EPS = 1e-30


@functools.partial(jax.jit, static_argnames=("block_batch",))
def gromov_wasserstein(A, Bm, p, q, *, block_batch=32):
    """Proximal-point entropic GW.  A:(B,N,N), Bm:(B,M,M), p:(B,N,1), q:(B,1,M) -> T:(B,N,M)."""
    f32 = jnp.float32
    Bsz, N, _ = A.shape
    M = Bm.shape[1]
    if N != M:
        raise ValueError("lane-packed GW kernel assumes square problems (N == M)")

    A = A.astype(f32)
    Bm = Bm.astype(f32)
    p = p.astype(f32)
    q = q.astype(f32)

    # norm='Linf' folded into the wrapper-side packing: the kernel never holds
    # normalized A/Bm copies live across the GW iterations.
    a_max = jnp.max(jnp.abs(A), axis=(1, 2), keepdims=True)
    b_max = jnp.max(jnp.abs(Bm), axis=(1, 2), keepdims=True)
    An = A / (a_max + 1e-16)
    Bn = Bm / (b_max + 1e-16)

    # ---- lane packing: `group` problems share one 128-lane row ----------------
    group = max(1, 128 // M)          # 8 problems x M=16 lanes -> 128 lanes
    lanes = group * M

    # Groups per grid step: big blocks amortize per-step overhead and give the
    # scheduler independent batch chains to hide the serial 15x15 iteration
    # latency, but keep >= 2 grid steps so the "parallel" axis can shard across
    # v7x's two TensorCores (B=16 demo -> gps=1, grid=2).
    n_groups = -(-Bsz // group)
    gps_cap = max(1, block_batch // group)
    gps = max(1, min(gps_cap, n_groups // 2)) if n_groups >= 2 else 1
    G = -(-n_groups // gps) * gps     # padded number of lane groups
    Bpad = G * group

    pad = Bpad - Bsz
    if pad:                           # zero-padded problems stay identically zero
        An = jnp.pad(An, ((0, pad), (0, 0), (0, 0)))
        Bn = jnp.pad(Bn, ((0, pad), (0, 0), (0, 0)))
        p = jnp.pad(p, ((0, pad), (0, 0), (0, 0)))
        q = jnp.pad(q, ((0, pad), (0, 0), (0, 0)))

    def lane_pack(x):                 # (Bpad, r, c) -> (G, r, group*c), batch -> lanes
        _, r, c = x.shape
        return (x.reshape(G, group, r, c).transpose(0, 2, 1, 3)
                 .reshape(G, r, group * c))

    # A_left[g, i, b*N+k]     = An[b, i, k]
    A_left = lane_pack(An)                                          # (G, N, lanes)
    # Bm_bdT[g, b*M+k, b*M+j] = Bn[b, j, k]   (block-diagonal of Bn^T)
    eye = jnp.eye(group, dtype=f32)
    BnT = jnp.swapaxes(Bn, 1, 2).reshape(G, group, M, M)
    Bm_bdT = jnp.einsum("ab,gaij->gaibj", eye, BnT).reshape(G, lanes, lanes)
    # const[b,i,j] = sum_k An[b,i,k]^2 p[b,k] + sum_k Bn[b,j,k]^2 q[b,k]
    Ap2 = jnp.einsum("bik,bko->bio", An * An, p)                    # (Bpad, N, 1)
    Bq2 = jnp.einsum("bok,bjk->boj", q, Bn * Bn)                    # (Bpad, 1, M)
    const_l = lane_pack(Ap2 + Bq2)                                  # (G, N, lanes)
    p_lane = lane_pack(jnp.broadcast_to(p, (Bpad, N, M)))           # (G, N, lanes)
    q_lane = lane_pack(q)                                           # (G, 1, lanes)
    # Block-diagonal ones mask: delta(lane group).  Used both for the segmented
    # lane reduce (MXU matmul) and to block-diagonalize T for the GW product.
    gidx = jnp.arange(lanes, dtype=jnp.int32) // M
    ones_bd = (gidx[:, None] == gidx[None, :]).astype(f32)          # (lanes, lanes)

    def gw_kernel(a_ref, b_ref, c_ref, p_ref, q_ref, ones_ref, t_ref):
        p_l = p_ref[...]              # (gps, N, lanes)  marginal, broadcast over lanes
        q_l = q_ref[...]              # (gps, 1, lanes)

        def bmm(x, y):                # batched (gps) MXU matmul, f32 accumulate
            return lax.dot_general(x, y, (((2,), (1,)), ((0,), (0,))),
                                   preferred_element_type=jnp.float32)

        def seg_sum_lanes(x):
            # Per-problem sum over its M lanes, broadcast back over those lanes:
            # one MXU matmul against the block-diagonal ones matrix.
            return lax.dot_general(x, ones_ref[...], (((2,), (0,)), ((), ())),
                                   preferred_element_type=jnp.float32)

        def sink_update(K, u, v, exact):
            kv = seg_sum_lanes(K * v)                               # (gps, N, lanes)
            if exact:
                u = p_l / (kv + EPS)
            else:
                u = p_l * pl.reciprocal(kv + EPS, approx=True)
            uk = jnp.sum(K * u, axis=-2, keepdims=True)             # (gps, 1, lanes)
            if exact:
                v = q_l / (uk + EPS)
            else:
                v = q_l * pl.reciprocal(uk + EPS, approx=True)
            return u, v

        def gw_body(_, T):
            # Block-diagonal expansion of T: both GW products become full-depth,
            # lane-dense MXU matmuls with no relayout of the Sinkhorn slabs.
            T_exp = jnp.concatenate([T] * group, axis=-2) * ones_ref[...]
            AT = bmm(a_ref[...], T_exp)          # (A @ T)      in lane layout
            ATB = bmm(AT, b_ref[...])            # (A T Bm^T)   in lane layout
            C = c_ref[...] - 2.0 * ATB
            # Row-wise shift (Sinkhorn-invariant) keeps the Gibbs kernel in f32 range.
            C = C - jnp.min(C, axis=-1, keepdims=True)
            K = jnp.exp(-C * INV_TAU) * T        # proximal-point Gibbs kernel

            def body(_, carry):
                return sink_update(K, carry[0], carry[1], exact=False)

            u, v = lax.fori_loop(0, PSINKHORN_ITERS - 1, body,
                                 (jnp.ones_like(p_l), jnp.ones_like(q_l)),
                                 unroll=True)
            u, v = sink_update(K, u, v, exact=True)   # exact final update
            return (u * K) * v

        T0 = p_l * q_l                # outer product of the marginals
        t_ref[...] = lax.fori_loop(0, GROMOV_ITERS, gw_body, T0)

    out = pl.pallas_call(
        gw_kernel,
        out_shape=jax.ShapeDtypeStruct((G, N, lanes), f32),
        grid=(G // gps,),
        in_specs=[
            pl.BlockSpec((gps, N, lanes), lambda s: (s, 0, 0)),
            pl.BlockSpec((gps, lanes, lanes), lambda s: (s, 0, 0)),
            pl.BlockSpec((gps, N, lanes), lambda s: (s, 0, 0)),
            pl.BlockSpec((gps, N, lanes), lambda s: (s, 0, 0)),
            pl.BlockSpec((gps, 1, lanes), lambda s: (s, 0, 0)),
            pl.BlockSpec((lanes, lanes), lambda s: (0, 0)),
        ],
        out_specs=pl.BlockSpec((gps, N, lanes), lambda s: (s, 0, 0)),
        compiler_params=pltpu.CompilerParams(
            dimension_semantics=("parallel",)),
    )(A_left, Bm_bdT, const_l, p_lane, q_lane, ones_bd)

    # Unpack lane layout (G, N, group*M) -> (B, N, M)
    T = (out.reshape(G, N, group, M).transpose(0, 2, 1, 3)
            .reshape(Bpad, N, M))[:Bsz]
    return T


if __name__ == "__main__":
    key = jax.random.PRNGKey(0)
    Bsz, N, M = 16, 16, 16

    kA, kB = jax.random.split(key)
    A = jax.random.uniform(kA, (Bsz, N, N), dtype=jnp.float32)
    A = 0.5 * (A + jnp.swapaxes(A, 1, 2))           # symmetric intra-graph affinities
    Bm = jax.random.uniform(kB, (Bsz, M, M), dtype=jnp.float32)
    Bm = 0.5 * (Bm + jnp.swapaxes(Bm, 1, 2))

    p = jnp.full((Bsz, N, 1), 1.0 / N, dtype=jnp.float32)   # uniform marginals
    q = jnp.full((Bsz, 1, M), 1.0 / M, dtype=jnp.float32)

    T = gromov_wasserstein(A, Bm, p, q)
    jax.block_until_ready(T)

    # sanity: transport plan is finite and approximately satisfies the marginals
    assert T.shape == (Bsz, N, M)
    assert bool(jnp.all(jnp.isfinite(T)))
    # v is updated last with an exact divide -> column marginals are tight
    assert bool(jnp.allclose(jnp.sum(T, axis=1, keepdims=True), q, atol=1e-5))
    # row marginals depend on Sinkhorn convergence after the final v-update
    assert bool(jnp.allclose(jnp.sum(T, axis=2, keepdims=True), p, atol=2e-3))
    print("KERNEL_OK")
</pallas_src>

<mosaic_0001>
module attributes {stable_mosaic.version = 11 : i64} {
  func.func @gw_kernel(%arg0: i32, %arg1: memref<1x16x128xf32, #tpu.memory_space<vmem>>, %arg2: memref<1x128x128xf32, #tpu.memory_space<vmem>>, %arg3: memref<1x16x128xf32, #tpu.memory_space<vmem>>, %arg4: memref<1x16x128xf32, #tpu.memory_space<vmem>>, %arg5: memref<1x1x128xf32, #tpu.memory_space<vmem>>, %arg6: memref<128x128xf32, #tpu.memory_space<vmem>>, %arg7: memref<1x16x128xf32, #tpu.memory_space<vmem>>) attributes {dimension_semantics = [#tpu.dimension_semantics<parallel>], iteration_bounds = array<i64: 2>, scalar_prefetch = 0 : i64, scratch_operands = 0 : i64, tpu.core_type = #tpu.core_type<tc>, window_params = [{transform_indices = @transform_0, window_bounds = array<i64: 1, 16, 128>}, {transform_indices = @transform_1, window_bounds = array<i64: 1, 128, 128>}, {transform_indices = @transform_2, window_bounds = array<i64: 1, 16, 128>}, {transform_indices = @transform_3, window_bounds = array<i64: 1, 16, 128>}, {transform_indices = @transform_4, window_bounds = array<i64: 1, 1, 128>}, {pipeline_mode = #tpu.pipeline_mode<synchronous>, transform_indices = @transform_5, window_bounds = array<i64: 128, 128>}, {transform_indices = @transform_6, window_bounds = array<i64: 1, 16, 128>}]} {
    %c0 = arith.constant 0 : index
    %c0_0 = arith.constant 0 : index
    %c0_1 = arith.constant 0 : index
    %0 = vector.load %arg4[%c0, %c0_0, %c0_1] : memref<1x16x128xf32, #tpu.memory_space<vmem>>, vector<1x16x128xf32>
    %c0_2 = arith.constant 0 : index
    %c0_3 = arith.constant 0 : index
    %c0_4 = arith.constant 0 : index
    %1 = vector.load %arg5[%c0_2, %c0_3, %c0_4] : memref<1x1x128xf32, #tpu.memory_space<vmem>>, vector<1x1x128xf32>
    %2 = vector.broadcast %1 : vector<1x1x128xf32> to vector<1x16x128xf32>
    %3 = arith.mulf %0, %2 : vector<1x16x128xf32>
    %c0_i32 = arith.constant 0 : i32
    %c15_i32 = arith.constant 15 : i32
    %4 = arith.addi %c0_i32, %c15_i32 : i32
    %c1_i32 = arith.constant 1 : i32
    %5 = scf.for %arg8 = %c0_i32 to %4 step %c1_i32 iter_args(%arg9 = %3) -> (vector<1x16x128xf32>)  : i32 {
      %7 = tpu.concatenate %arg9, %arg9, %arg9, %arg9, %arg9, %arg9, %arg9, %arg9 in 1 : vector<1x16x128xf32>, vector<1x16x128xf32>, vector<1x16x128xf32>, vector<1x16x128xf32>, vector<1x16x128xf32>, vector<1x16x128xf32>, vector<1x16x128xf32>, vector<1x16x128xf32> -> vector<1x128x128xf32>
      %c0_8 = arith.constant 0 : index
      %c0_9 = arith.constant 0 : index
      %8 = vector.load %arg6[%c0_8, %c0_9] : memref<128x128xf32, #tpu.memory_space<vmem>>, vector<128x128xf32>
      %9 = vector.shape_cast %8 : vector<128x128xf32> to vector<1x128x128xf32>
      %10 = arith.mulf %7, %9 : vector<1x128x128xf32>
      %c0_10 = arith.constant 0 : index
      %c0_11 = arith.constant 0 : index
      %c0_12 = arith.constant 0 : index
      %11 = vector.load %arg1[%c0_10, %c0_11, %c0_12] : memref<1x16x128xf32, #tpu.memory_space<vmem>>, vector<1x16x128xf32>
      %cst = arith.constant dense<0.000000e+00> : vector<1x16x128xf32>
      %12 = tpu.matmul %11, %10, %cst {dimension_numbers = #tpu.dot_dimension_numbers<[2], [1], [1], [2], [0, 0, 0, 1, 1, 2], [0], [0]>} : vector<1x16x128xf32>, vector<1x128x128xf32>, vector<1x16x128xf32> -> vector<1x16x128xf32>
      %c0_13 = arith.constant 0 : index
      %c0_14 = arith.constant 0 : index
      %c0_15 = arith.constant 0 : index
      %13 = vector.load %arg2[%c0_13, %c0_14, %c0_15] : memref<1x128x128xf32, #tpu.memory_space<vmem>>, vector<1x128x128xf32>
      %cst_16 = arith.constant dense<0.000000e+00> : vector<1x16x128xf32>
      %14 = tpu.matmul %12, %13, %cst_16 {dimension_numbers = #tpu.dot_dimension_numbers<[2], [1], [1], [2], [0, 0, 0, 1, 1, 2], [0], [0]>} : vector<1x16x128xf32>, vector<1x128x128xf32>, vector<1x16x128xf32> -> vector<1x16x128xf32>
      %c0_17 = arith.constant 0 : index
      %c0_18 = arith.constant 0 : index
      %c0_19 = arith.constant 0 : index
      %15 = vector.load %arg3[%c0_17, %c0_18, %c0_19] : memref<1x16x128xf32, #tpu.memory_space<vmem>>, vector<1x16x128xf32>
      %cst_20 = arith.constant 2.000000e+00 : f32
      %16 = vector.broadcast %cst_20 : f32 to vector<1x16x128xf32>
      %17 = arith.mulf %16, %14 : vector<1x16x128xf32>
      %18 = arith.subf %15, %17 : vector<1x16x128xf32>
      %cst_21 = arith.constant dense<0x7F800000> : vector<1x16xf32>
      %19 = vector.multi_reduction <minimumf>, %18, %cst_21 [2] : vector<1x16x128xf32> to vector<1x16xf32>
      %20 = vector.shape_cast %19 : vector<1x16xf32> to vector<1x16x1xf32>
      %21 = vector.broadcast %20 : vector<1x16x1xf32> to vector<1x16x128xf32>
      %22 = arith.subf %18, %21 : vector<1x16x128xf32>
      %cst_22 = arith.constant 0.000000e+00 : f32
      %23 = vector.broadcast %cst_22 : f32 to vector<1x16x128xf32>
      %24 = arith.subf %23, %22 : vector<1x16x128xf32>
      %cst_23 = arith.constant 1.000000e+01 : f32
      %25 = vector.broadcast %cst_23 : f32 to vector<1x16x128xf32>
      %26 = arith.mulf %24, %25 : vector<1x16x128xf32>
      %27 = math.exp %26 : vector<1x16x128xf32>
      %28 = arith.mulf %27, %arg9 : vector<1x16x128xf32>
      %cst_24 = arith.constant 1.000000e+00 : f32
      %29 = vector.broadcast %cst_24 : f32 to vector<1x1x128xf32>
      %c0_i32_25 = arith.constant 0 : i32
      %30 = vector.broadcast %29 : vector<1x1x128xf32> to vector<1x16x128xf32>
      %31 = arith.mulf %28, %30 : vector<1x16x128xf32>
      %c0_26 = arith.constant 0 : index
      %c0_27 = arith.constant 0 : index
      %32 = vector.load %arg6[%c0_26, %c0_27] : memref<128x128xf32, #tpu.memory_space<vmem>>, vector<128x128xf32>
      %cst_28 = arith.constant dense<0.000000e+00> : vector<1x16x128xf32>
      %33 = tpu.matmul %31, %32, %cst_28 {dimension_numbers = #tpu.dot_dimension_numbers<[2], [0], [0, 1], [1], [0, 0, 0, 1, 1, 1], [], []>} : vector<1x16x128xf32>, vector<128x128xf32>, vector<1x16x128xf32> -> vector<1x16x128xf32>
      %cst_29 = arith.constant 1.000000e-30 : f32
      %34 = vector.broadcast %cst_29 : f32 to vector<1x16x128xf32>
      %35 = arith.addf %33, %34 : vector<1x16x128xf32>
      %36 = tpu.reciprocal %35 {approx = true} : vector<1x16x128xf32> -> vector<1x16x128xf32>
      %37 = arith.mulf %0, %36 : vector<1x16x128xf32>
      %38 = arith.mulf %28, %37 : vector<1x16x128xf32>
      %cst_30 = arith.constant dense<0.000000e+00> : vector<1x128xf32>
      %39 = vector.multi_reduction <add>, %38, %cst_30 [1] : vector<1x16x128xf32> to vector<1x128xf32>
      %40 = vector.shape_cast %39 : vector<1x128xf32> to vector<1x1x128xf32>
      %cst_31 = arith.constant 1.000000e-30 : f32
      %41 = vector.broadcast %cst_31 : f32 to vector<1x1x128xf32>
      %42 = arith.addf %40, %41 : vector<1x1x128xf32>
      %43 = tpu.reciprocal %42 {approx = true} : vector<1x1x128xf32> -> vector<1x1x128xf32>
      %44 = arith.mulf %1, %43 : vector<1x1x128xf32>
      %c1_i32_32 = arith.constant 1 : i32
      %45 = vector.broadcast %44 : vector<1x1x128xf32> to vector<1x16x128xf32>
      %46 = arith.mulf %28, %45 : vector<1x16x128xf32>
      %c0_33 = arith.constant 0 : index
      %c0_34 = arith.constant 0 : index
      %47 = vector.load %arg6[%c0_33, %c0_34] : memref<128x128xf32, #tpu.memory_space<vmem>>, vector<128x128xf32>
      %cst_35 = arith.constant dense<0.000000e+00> : vector<1x16x128xf32>
      %48 = tpu.matmul %46, %47, %cst_35 {dimension_numbers = #tpu.dot_dimension_numbers<[2], [0], [0, 1], [1], [0, 0, 0, 1, 1, 1], [], []>} : vector<1x16x128xf32>, vector<128x128xf32>, vector<1x16x128xf32> -> vector<1x16x128xf32>
      %cst_36 = arith.constant 1.000000e-30 : f32
      %49 = vector.broadcast %cst_36 : f32 to vector<1x16x128xf32>
      %50 = arith.addf %48, %49 : vector<1x16x128xf32>
      %51 = tpu.reciprocal %50 {approx = true} : vector<1x16x128xf32> -> vector<1x16x128xf32>
      %52 = arith.mulf %0, %51 : vector<1x16x128xf32>
      %53 = arith.mulf %28, %52 : vector<1x16x128xf32>
      %cst_37 = arith.constant dense<0.000000e+00> : vector<1x128xf32>
      %54 = vector.multi_reduction <add>, %53, %cst_37 [1] : vector<1x16x128xf32> to vector<1x128xf32>
      %55 = vector.shape_cast %54 : vector<1x128xf32> to vector<1x1x128xf32>
      %cst_38 = arith.constant 1.000000e-30 : f32
      %56 = vector.broadcast %cst_38 : f32 to vector<1x1x128xf32>
      %57 = arith.addf %55, %56 : vector<1x1x128xf32>
      %58 = tpu.reciprocal %57 {approx = true} : vector<1x1x128xf32> -> vector<1x1x128xf32>
      %59 = arith.mulf %1, %58 : vector<1x1x128xf32>
      %c2_i32 = arith.constant 2 : i32
      %60 = vector.broadcast %59 : vector<1x1x128xf32> to vector<1x16x128xf32>
      %61 = arith.mulf %28, %60 : vector<1x16x128xf32>
      %c0_39 = arith.constant 0 : index
      %c0_40 = arith.constant 0 : index
      %62 = vector.load %arg6[%c0_39, %c0_40] : memref<128x128xf32, #tpu.memory_space<vmem>>, vector<128x128xf32>
      %cst_41 = arith.constant dense<0.000000e+00> : vector<1x16x128xf32>
      %63 = tpu.matmul %61, %62, %cst_41 {dimension_numbers = #tpu.dot_dimension_numbers<[2], [0], [0, 1], [1], [0, 0, 0, 1, 1, 1], [], []>} : vector<1x16x128xf32>, vector<128x128xf32>, vector<1x16x128xf32> -> vector<1x16x128xf32>
      %cst_42 = arith.constant 1.000000e-30 : f32
      %64 = vector.broadcast %cst_42 : f32 to vector<1x16x128xf32>
      %65 = arith.addf %63, %64 : vector<1x16x128xf32>
      %66 = tpu.reciprocal %65 {approx = true} : vector<1x16x128xf32> -> vector<1x16x128xf32>
      %67 = arith.mulf %0, %66 : vector<1x16x128xf32>
      %68 = arith.mulf %28, %67 : vector<1x16x128xf32>
      %cst_43 = arith.constant dense<0.000000e+00> : vector<1x128xf32>
      %69 = vector.multi_reduction <add>, %68, %cst_43 [1] : vector<1x16x128xf32> to vector<1x128xf32>
      %70 = vector.shape_cast %69 : vector<1x128xf32> to vector<1x1x128xf32>
      %cst_44 = arith.constant 1.000000e-30 : f32
      %71 = vector.broadcast %cst_44 : f32 to vector<1x1x128xf32>
      %72 = arith.addf %70, %71 : vector<1x1x128xf32>
      %73 = tpu.reciprocal %72 {approx = true} : vector<1x1x128xf32> -> vector<1x1x128xf32>
      %74 = arith.mulf %1, %73 : vector<1x1x128xf32>
      %c3_i32 = arith.constant 3 : i32
      %75 = vector.broadcast %74 : vector<1x1x128xf32> to vector<1x16x128xf32>
      %76 = arith.mulf %28, %75 : vector<1x16x128xf32>
      %c0_45 = arith.constant 0 : index
      %c0_46 = arith.constant 0 : index
      %77 = vector.load %arg6[%c0_45, %c0_46] : memref<128x128xf32, #tpu.memory_space<vmem>>, vector<128x128xf32>
      %cst_47 = arith.constant dense<0.000000e+00> : vector<1x16x128xf32>
      %78 = tpu.matmul %76, %77, %cst_47 {dimension_numbers = #tpu.dot_dimension_numbers<[2], [0], [0, 1], [1], [0, 0, 0, 1, 1, 1], [], []>} : vector<1x16x128xf32>, vector<128x128xf32>, vector<1x16x128xf32> -> vector<1x16x128xf32>
      %cst_48 = arith.constant 1.000000e-30 : f32
      %79 = vector.broadcast %cst_48 : f32 to vector<1x16x128xf32>
      %80 = arith.addf %78, %79 : vector<1x16x128xf32>
      %81 = tpu.reciprocal %80 {approx = true} : vector<1x16x128xf32> -> vector<1x16x128xf32>
      %82 = arith.mulf %0, %81 : vector<1x16x128xf32>
      %83 = arith.mulf %28, %82 : vector<1x16x128xf32>
      %cst_49 = arith.constant dense<0.000000e+00> : vector<1x128xf32>
      %84 = vector.multi_reduction <add>, %83, %cst_49 [1] : vector<1x16x128xf32> to vector<1x128xf32>
      %85 = vector.shape_cast %84 : vector<1x128xf32> to vector<1x1x128xf32>
      %cst_50 = arith.constant 1.000000e-30 : f32
      %86 = vector.broadcast %cst_50 : f32 to vector<1x1x128xf32>
      %87 = arith.addf %85, %86 : vector<1x1x128xf32>
      %88 = tpu.reciprocal %87 {approx = true} : vector<1x1x128xf32> -> vector<1x1x128xf32>
      %89 = arith.mulf %1, %88 : vector<1x1x128xf32>
      %c4_i32 = arith.constant 4 : i32
      %90 = vector.broadcast %89 : vector<1x1x128xf32> to vector<1x16x128xf32>
      %91 = arith.mulf %28, %90 : vector<1x16x128xf32>
      %c0_51 = arith.constant 0 : index
      %c0_52 = arith.constant 0 : index
      %92 = vector.load %arg6[%c0_51, %c0_52] : memref<128x128xf32, #tpu.memory_space<vmem>>, vector<128x128xf32>
      %cst_53 = arith.constant dense<0.000000e+00> : vector<1x16x128xf32>
      %93 = tpu.matmul %91, %92, %cst_53 {dimension_numbers = #tpu.dot_dimension_numbers<[2], [0], [0, 1], [1], [0, 0, 0, 1, 1, 1], [], []>} : vector<1x16x128xf32>, vector<128x128xf32>, vector<1x16x128xf32> -> vector<1x16x128xf32>
      %cst_54 = arith.constant 1.000000e-30 : f32
      %94 = vector.broadcast %cst_54 : f32 to vector<1x16x128xf32>
      %95 = arith.addf %93, %94 : vector<1x16x128xf32>
      %96 = tpu.reciprocal %95 {approx = true} : vector<1x16x128xf32> -> vector<1x16x128xf32>
      %97 = arith.mulf %0, %96 : vector<1x16x128xf32>
      %98 = arith.mulf %28, %97 : vector<1x16x128xf32>
      %cst_55 = arith.constant dense<0.000000e+00> : vector<1x128xf32>
      %99 = vector.multi_reduction <add>, %98, %cst_55 [1] : vector<1x16x128xf32> to vector<1x128xf32>
      %100 = vector.shape_cast %99 : vector<1x128xf32> to vector<1x1x128xf32>
      %cst_56 = arith.constant 1.000000e-30 : f32
      %101 = vector.broadcast %cst_56 : f32 to vector<1x1x128xf32>
      %102 = arith.addf %100, %101 : vector<1x1x128xf32>
      %103 = tpu.reciprocal %102 {approx = true} : vector<1x1x128xf32> -> vector<1x1x128xf32>
      %104 = arith.mulf %1, %103 : vector<1x1x128xf32>
      %c5_i32 = arith.constant 5 : i32
      %105 = vector.broadcast %104 : vector<1x1x128xf32> to vector<1x16x128xf32>
      %106 = arith.mulf %28, %105 : vector<1x16x128xf32>
      %c0_57 = arith.constant 0 : index
      %c0_58 = arith.constant 0 : index
      %107 = vector.load %arg6[%c0_57, %c0_58] : memref<128x128xf32, #tpu.memory_space<vmem>>, vector<128x128xf32>
      %cst_59 = arith.constant dense<0.000000e+00> : vector<1x16x128xf32>
      %108 = tpu.matmul %106, %107, %cst_59 {dimension_numbers = #tpu.dot_dimension_numbers<[2], [0], [0, 1], [1], [0, 0, 0, 1, 1, 1], [], []>} : vector<1x16x128xf32>, vector<128x128xf32>, vector<1x16x128xf32> -> vector<1x16x128xf32>
      %cst_60 = arith.constant 1.000000e-30 : f32
      %109 = vector.broadcast %cst_60 : f32 to vector<1x16x128xf32>
      %110 = arith.addf %108, %109 : vector<1x16x128xf32>
      %111 = tpu.reciprocal %110 {approx = true} : vector<1x16x128xf32> -> vector<1x16x128xf32>
      %112 = arith.mulf %0, %111 : vector<1x16x128xf32>
      %113 = arith.mulf %28, %112 : vector<1x16x128xf32>
      %cst_61 = arith.constant dense<0.000000e+00> : vector<1x128xf32>
      %114 = vector.multi_reduction <add>, %113, %cst_61 [1] : vector<1x16x128xf32> to vector<1x128xf32>
      %115 = vector.shape_cast %114 : vector<1x128xf32> to vector<1x1x128xf32>
      %cst_62 = arith.constant 1.000000e-30 : f32
      %116 = vector.broadcast %cst_62 : f32 to vector<1x1x128xf32>
      %117 = arith.addf %115, %116 : vector<1x1x128xf32>
      %118 = tpu.reciprocal %117 {approx = true} : vector<1x1x128xf32> -> vector<1x1x128xf32>
      %119 = arith.mulf %1, %118 : vector<1x1x128xf32>
      %c6_i32 = arith.constant 6 : i32
      %120 = vector.broadcast %119 : vector<1x1x128xf32> to vector<1x16x128xf32>
      %121 = arith.mulf %28, %120 : vector<1x16x128xf32>
      %c0_63 = arith.constant 0 : index
      %c0_64 = arith.constant 0 : index
      %122 = vector.load %arg6[%c0_63, %c0_64] : memref<128x128xf32, #tpu.memory_space<vmem>>, vector<128x128xf32>
      %cst_65 = arith.constant dense<0.000000e+00> : vector<1x16x128xf32>
      %123 = tpu.matmul %121, %122, %cst_65 {dimension_numbers = #tpu.dot_dimension_numbers<[2], [0], [0, 1], [1], [0, 0, 0, 1, 1, 1], [], []>} : vector<1x16x128xf32>, vector<128x128xf32>, vector<1x16x128xf32> -> vector<1x16x128xf32>
      %cst_66 = arith.constant 1.000000e-30 : f32
      %124 = vector.broadcast %cst_66 : f32 to vector<1x16x128xf32>
      %125 = arith.addf %123, %124 : vector<1x16x128xf32>
      %126 = tpu.reciprocal %125 {approx = true} : vector<1x16x128xf32> -> vector<1x16x128xf32>
      %127 = arith.mulf %0, %126 : vector<1x16x128xf32>
      %128 = arith.mulf %28, %127 : vector<1x16x128xf32>
      %cst_67 = arith.constant dense<0.000000e+00> : vector<1x128xf32>
      %129 = vector.multi_reduction <add>, %128, %cst_67 [1] : vector<1x16x128xf32> to vector<1x128xf32>
      %130 = vector.shape_cast %129 : vector<1x128xf32> to vector<1x1x128xf32>
      %cst_68 = arith.constant 1.000000e-30 : f32
      %131 = vector.broadcast %cst_68 : f32 to vector<1x1x128xf32>
      %132 = arith.addf %130, %131 : vector<1x1x128xf32>
      %133 = tpu.reciprocal %132 {approx = true} : vector<1x1x128xf32> -> vector<1x1x128xf32>
      %134 = arith.mulf %1, %133 : vector<1x1x128xf32>
      %c7_i32 = arith.constant 7 : i32
      %135 = vector.broadcast %134 : vector<1x1x128xf32> to vector<1x16x128xf32>
      %136 = arith.mulf %28, %135 : vector<1x16x128xf32>
      %c0_69 = arith.constant 0 : index
      %c0_70 = arith.constant 0 : index
      %137 = vector.load %arg6[%c0_69, %c0_70] : memref<128x128xf32, #tpu.memory_space<vmem>>, vector<128x128xf32>
      %cst_71 = arith.constant dense<0.000000e+00> : vector<1x16x128xf32>
      %138 = tpu.matmul %136, %137, %cst_71 {dimension_numbers = #tpu.dot_dimension_numbers<[2], [0], [0, 1], [1], [0, 0, 0, 1, 1, 1], [], []>} : vector<1x16x128xf32>, vector<128x128xf32>, vector<1x16x128xf32> -> vector<1x16x128xf32>
      %cst_72 = arith.constant 1.000000e-30 : f32
      %139 = vector.broadcast %cst_72 : f32 to vector<1x16x128xf32>
      %140 = arith.addf %138, %139 : vector<1x16x128xf32>
      %141 = tpu.reciprocal %140 {approx = true} : vector<1x16x128xf32> -> vector<1x16x128xf32>
      %142 = arith.mulf %0, %141 : vector<1x16x128xf32>
      %143 = arith.mulf %28, %142 : vector<1x16x128xf32>
      %cst_73 = arith.constant dense<0.000000e+00> : vector<1x128xf32>
      %144 = vector.multi_reduction <add>, %143, %cst_73 [1] : vector<1x16x128xf32> to vector<1x128xf32>
      %145 = vector.shape_cast %144 : vector<1x128xf32> to vector<1x1x128xf32>
      %cst_74 = arith.constant 1.000000e-30 : f32
      %146 = vector.broadcast %cst_74 : f32 to vector<1x1x128xf32>
      %147 = arith.addf %145, %146 : vector<1x1x128xf32>
      %148 = tpu.reciprocal %147 {approx = true} : vector<1x1x128xf32> -> vector<1x1x128xf32>
      %149 = arith.mulf %1, %148 : vector<1x1x128xf32>
      %c8_i32 = arith.constant 8 : i32
      %150 = vector.broadcast %149 : vector<1x1x128xf32> to vector<1x16x128xf32>
      %151 = arith.mulf %28, %150 : vector<1x16x128xf32>
      %c0_75 = arith.constant 0 : index
      %c0_76 = arith.constant 0 : index
      %152 = vector.load %arg6[%c0_75, %c0_76] : memref<128x128xf32, #tpu.memory_space<vmem>>, vector<128x128xf32>
      %cst_77 = arith.constant dense<0.000000e+00> : vector<1x16x128xf32>
      %153 = tpu.matmul %151, %152, %cst_77 {dimension_numbers = #tpu.dot_dimension_numbers<[2], [0], [0, 1], [1], [0, 0, 0, 1, 1, 1], [], []>} : vector<1x16x128xf32>, vector<128x128xf32>, vector<1x16x128xf32> -> vector<1x16x128xf32>
      %cst_78 = arith.constant 1.000000e-30 : f32
      %154 = vector.broadcast %cst_78 : f32 to vector<1x16x128xf32>
      %155 = arith.addf %153, %154 : vector<1x16x128xf32>
      %156 = tpu.reciprocal %155 {approx = true} : vector<1x16x128xf32> -> vector<1x16x128xf32>
      %157 = arith.mulf %0, %156 : vector<1x16x128xf32>
      %158 = arith.mulf %28, %157 : vector<1x16x128xf32>
      %cst_79 = arith.constant dense<0.000000e+00> : vector<1x128xf32>
      %159 = vector.multi_reduction <add>, %158, %cst_79 [1] : vector<1x16x128xf32> to vector<1x128xf32>
      %160 = vector.shape_cast %159 : vector<1x128xf32> to vector<1x1x128xf32>
      %cst_80 = arith.constant 1.000000e-30 : f32
      %161 = vector.broadcast %cst_80 : f32 to vector<1x1x128xf32>
      %162 = arith.addf %160, %161 : vector<1x1x128xf32>
      %163 = tpu.reciprocal %162 {approx = true} : vector<1x1x128xf32> -> vector<1x1x128xf32>
      %164 = arith.mulf %1, %163 : vector<1x1x128xf32>
      %c9_i32 = arith.constant 9 : i32
      %165 = vector.broadcast %164 : vector<1x1x128xf32> to vector<1x16x128xf32>
      %166 = arith.mulf %28, %165 : vector<1x16x128xf32>
      %c0_81 = arith.constant 0 : index
      %c0_82 = arith.constant 0 : index
      %167 = vector.load %arg6[%c0_81, %c0_82] : memref<128x128xf32, #tpu.memory_space<vmem>>, vector<128x128xf32>
      %cst_83 = arith.constant dense<0.000000e+00> : vector<1x16x128xf32>
      %168 = tpu.matmul %166, %167, %cst_83 {dimension_numbers = #tpu.dot_dimension_numbers<[2], [0], [0, 1], [1], [0, 0, 0, 1, 1, 1], [], []>} : vector<1x16x128xf32>, vector<128x128xf32>, vector<1x16x128xf32> -> vector<1x16x128xf32>
      %cst_84 = arith.constant 1.000000e-30 : f32
      %169 = vector.broadcast %cst_84 : f32 to vector<1x16x128xf32>
      %170 = arith.addf %168, %169 : vector<1x16x128xf32>
      %171 = tpu.reciprocal %170 {approx = true} : vector<1x16x128xf32> -> vector<1x16x128xf32>
      %172 = arith.mulf %0, %171 : vector<1x16x128xf32>
      %173 = arith.mulf %28, %172 : vector<1x16x128xf32>
      %cst_85 = arith.constant dense<0.000000e+00> : vector<1x128xf32>
      %174 = vector.multi_reduction <add>, %173, %cst_85 [1] : vector<1x16x128xf32> to vector<1x128xf32>
      %175 = vector.shape_cast %174 : vector<1x128xf32> to vector<1x1x128xf32>
      %cst_86 = arith.constant 1.000000e-30 : f32
      %176 = vector.broadcast %cst_86 : f32 to vector<1x1x128xf32>
      %177 = arith.addf %175, %176 : vector<1x1x128xf32>
      %178 = tpu.reciprocal %177 {approx = true} : vector<1x1x128xf32> -> vector<1x1x128xf32>
      %179 = arith.mulf %1, %178 : vector<1x1x128xf32>
      %c10_i32 = arith.constant 10 : i32
      %180 = vector.broadcast %179 : vector<1x1x128xf32> to vector<1x16x128xf32>
      %181 = arith.mulf %28, %180 : vector<1x16x128xf32>
      %c0_87 = arith.constant 0 : index
      %c0_88 = arith.constant 0 : index
      %182 = vector.load %arg6[%c0_87, %c0_88] : memref<128x128xf32, #tpu.memory_space<vmem>>, vector<128x128xf32>
      %cst_89 = arith.constant dense<0.000000e+00> : vector<1x16x128xf32>
      %183 = tpu.matmul %181, %182, %cst_89 {dimension_numbers = #tpu.dot_dimension_numbers<[2], [0], [0, 1], [1], [0, 0, 0, 1, 1, 1], [], []>} : vector<1x16x128xf32>, vector<128x128xf32>, vector<1x16x128xf32> -> vector<1x16x128xf32>
      %cst_90 = arith.constant 1.000000e-30 : f32
      %184 = vector.broadcast %cst_90 : f32 to vector<1x16x128xf32>
      %185 = arith.addf %183, %184 : vector<1x16x128xf32>
      %186 = tpu.reciprocal %185 {approx = true} : vector<1x16x128xf32> -> vector<1x16x128xf32>
      %187 = arith.mulf %0, %186 : vector<1x16x128xf32>
      %188 = arith.mulf %28, %187 : vector<1x16x128xf32>
      %cst_91 = arith.constant dense<0.000000e+00> : vector<1x128xf32>
      %189 = vector.multi_reduction <add>, %188, %cst_91 [1] : vector<1x16x128xf32> to vector<1x128xf32>
      %190 = vector.shape_cast %189 : vector<1x128xf32> to vector<1x1x128xf32>
      %cst_92 = arith.constant 1.000000e-30 : f32
      %191 = vector.broadcast %cst_92 : f32 to vector<1x1x128xf32>
      %192 = arith.addf %190, %191 : vector<1x1x128xf32>
      %193 = tpu.reciprocal %192 {approx = true} : vector<1x1x128xf32> -> vector<1x1x128xf32>
      %194 = arith.mulf %1, %193 : vector<1x1x128xf32>
      %c11_i32 = arith.constant 11 : i32
      %195 = vector.broadcast %194 : vector<1x1x128xf32> to vector<1x16x128xf32>
      %196 = arith.mulf %28, %195 : vector<1x16x128xf32>
      %c0_93 = arith.constant 0 : index
      %c0_94 = arith.constant 0 : index
      %197 = vector.load %arg6[%c0_93, %c0_94] : memref<128x128xf32, #tpu.memory_space<vmem>>, vector<128x128xf32>
      %cst_95 = arith.constant dense<0.000000e+00> : vector<1x16x128xf32>
      %198 = tpu.matmul %196, %197, %cst_95 {dimension_numbers = #tpu.dot_dimension_numbers<[2], [0], [0, 1], [1], [0, 0, 0, 1, 1, 1], [], []>} : vector<1x16x128xf32>, vector<128x128xf32>, vector<1x16x128xf32> -> vector<1x16x128xf32>
      %cst_96 = arith.constant 1.000000e-30 : f32
      %199 = vector.broadcast %cst_96 : f32 to vector<1x16x128xf32>
      %200 = arith.addf %198, %199 : vector<1x16x128xf32>
      %201 = tpu.reciprocal %200 {approx = true} : vector<1x16x128xf32> -> vector<1x16x128xf32>
      %202 = arith.mulf %0, %201 : vector<1x16x128xf32>
      %203 = arith.mulf %28, %202 : vector<1x16x128xf32>
      %cst_97 = arith.constant dense<0.000000e+00> : vector<1x128xf32>
      %204 = vector.multi_reduction <add>, %203, %cst_97 [1] : vector<1x16x128xf32> to vector<1x128xf32>
      %205 = vector.shape_cast %204 : vector<1x128xf32> to vector<1x1x128xf32>
      %cst_98 = arith.constant 1.000000e-30 : f32
      %206 = vector.broadcast %cst_98 : f32 to vector<1x1x128xf32>
      %207 = arith.addf %205, %206 : vector<1x1x128xf32>
      %208 = tpu.reciprocal %207 {approx = true} : vector<1x1x128xf32> -> vector<1x1x128xf32>
      %209 = arith.mulf %1, %208 : vector<1x1x128xf32>
      %c12_i32 = arith.constant 12 : i32
      %210 = vector.broadcast %209 : vector<1x1x128xf32> to vector<1x16x128xf32>
      %211 = arith.mulf %28, %210 : vector<1x16x128xf32>
      %c0_99 = arith.constant 0 : index
      %c0_100 = arith.constant 0 : index
      %212 = vector.load %arg6[%c0_99, %c0_100] : memref<128x128xf32, #tpu.memory_space<vmem>>, vector<128x128xf32>
      %cst_101 = arith.constant dense<0.000000e+00> : vector<1x16x128xf32>
      %213 = tpu.matmul %211, %212, %cst_101 {dimension_numbers = #tpu.dot_dimension_numbers<[2], [0], [0, 1], [1], [0, 0, 0, 1, 1, 1], [], []>} : vector<1x16x128xf32>, vector<128x128xf32>, vector<1x16x128xf32> -> vector<1x16x128xf32>
      %cst_102 = arith.constant 1.000000e-30 : f32
      %214 = vector.broadcast %cst_102 : f32 to vector<1x16x128xf32>
      %215 = arith.addf %213, %214 : vector<1x16x128xf32>
      %216 = tpu.reciprocal %215 {approx = true} : vector<1x16x128xf32> -> vector<1x16x128xf32>
      %217 = arith.mulf %0, %216 : vector<1x16x128xf32>
      %218 = arith.mulf %28, %217 : vector<1x16x128xf32>
      %cst_103 = arith.constant dense<0.000000e+00> : vector<1x128xf32>
      %219 = vector.multi_reduction <add>, %218, %cst_103 [1] : vector<1x16x128xf32> to vector<1x128xf32>
      %220 = vector.shape_cast %219 : vector<1x128xf32> to vector<1x1x128xf32>
      %cst_104 = arith.constant 1.000000e-30 : f32
      %221 = vector.broadcast %cst_104 : f32 to vector<1x1x128xf32>
      %222 = arith.addf %220, %221 : vector<1x1x128xf32>
      %223 = tpu.reciprocal %222 {approx = true} : vector<1x1x128xf32> -> vector<1x1x128xf32>
      %224 = arith.mulf %1, %223 : vector<1x1x128xf32>
      %c13_i32 = arith.constant 13 : i32
      %225 = vector.broadcast %224 : vector<1x1x128xf32> to vector<1x16x128xf32>
      %226 = arith.mulf %28, %225 : vector<1x16x128xf32>
      %c0_105 = arith.constant 0 : index
      %c0_106 = arith.constant 0 : index
      %227 = vector.load %arg6[%c0_105, %c0_106] : memref<128x128xf32, #tpu.memory_space<vmem>>, vector<128x128xf32>
      %cst_107 = arith.constant dense<0.000000e+00> : vector<1x16x128xf32>
      %228 = tpu.matmul %226, %227, %cst_107 {dimension_numbers = #tpu.dot_dimension_numbers<[2], [0], [0, 1], [1], [0, 0, 0, 1, 1, 1], [], []>} : vector<1x16x128xf32>, vector<128x128xf32>, vector<1x16x128xf32> -> vector<1x16x128xf32>
      %cst_108 = arith.constant 1.000000e-30 : f32
      %229 = vector.broadcast %cst_108 : f32 to vector<1x16x128xf32>
      %230 = arith.addf %228, %229 : vector<1x16x128xf32>
      %231 = tpu.reciprocal %230 {approx = true} : vector<1x16x128xf32> -> vector<1x16x128xf32>
      %232 = arith.mulf %0, %231 : vector<1x16x128xf32>
      %233 = arith.mulf %28, %232 : vector<1x16x128xf32>
      %cst_109 = arith.constant dense<0.000000e+00> : vector<1x128xf32>
      %234 = vector.multi_reduction <add>, %233, %cst_109 [1] : vector<1x16x128xf32> to vector<1x128xf32>
      %235 = vector.shape_cast %234 : vector<1x128xf32> to vector<1x1x128xf32>
      %cst_110 = arith.constant 1.000000e-30 : f32
      %236 = vector.broadcast %cst_110 : f32 to vector<1x1x128xf32>
      %237 = arith.addf %235, %236 : vector<1x1x128xf32>
      %238 = tpu.reciprocal %237 {approx = true} : vector<1x1x128xf32> -> vector<1x1x128xf32>
      %239 = arith.mulf %1, %238 : vector<1x1x128xf32>
      %240 = vector.broadcast %239 : vector<1x1x128xf32> to vector<1x16x128xf32>
      %241 = arith.mulf %28, %240 : vector<1x16x128xf32>
      %c0_111 = arith.constant 0 : index
      %c0_112 = arith.constant 0 : index
      %242 = vector.load %arg6[%c0_111, %c0_112] : memref<128x128xf32, #tpu.memory_space<vmem>>, vector<128x128xf32>
      %cst_113 = arith.constant dense<0.000000e+00> : vector<1x16x128xf32>
      %243 = tpu.matmul %241, %242, %cst_113 {dimension_numbers = #tpu.dot_dimension_numbers<[2], [0], [0, 1], [1], [0, 0, 0, 1, 1, 1], [], []>} : vector<1x16x128xf32>, vector<128x128xf32>, vector<1x16x128xf32> -> vector<1x16x128xf32>
      %cst_114 = arith.constant 1.000000e-30 : f32
      %244 = vector.broadcast %cst_114 : f32 to vector<1x16x128xf32>
      %245 = arith.addf %243, %244 : vector<1x16x128xf32>
      %246 = arith.divf %0, %245 : vector<1x16x128xf32>
      %247 = arith.mulf %28, %246 : vector<1x16x128xf32>
      %cst_115 = arith.constant dense<0.000000e+00> : vector<1x128xf32>
      %248 = vector.multi_reduction <add>, %247, %cst_115 [1] : vector<1x16x128xf32> to vector<1x128xf32>
      %249 = vector.shape_cast %248 : vector<1x128xf32> to vector<1x1x128xf32>
      %cst_116 = arith.constant 1.000000e-30 : f32
      %250 = vector.broadcast %cst_116 : f32 to vector<1x1x128xf32>
      %251 = arith.addf %249, %250 : vector<1x1x128xf32>
      %252 = arith.divf %1, %251 : vector<1x1x128xf32>
      %253 = arith.mulf %246, %28 : vector<1x16x128xf32>
      %254 = vector.broadcast %252 : vector<1x1x128xf32> to vector<1x16x128xf32>
      %255 = arith.mulf %253, %254 : vector<1x16x128xf32>
      scf.yield %255 : vector<1x16x128xf32>
    }
    %c0_5 = arith.constant 0 : index
    %c0_6 = arith.constant 0 : index
    %c0_7 = arith.constant 0 : index
    %6 = vector.load %arg7[%c0_5, %c0_6, %c0_7] : memref<1x16x128xf32, #tpu.memory_space<vmem>>, vector<1x16x128xf32>
    tpu.vector_store %arg7[%c0_5, %c0_6, %c0_7], %5 {strides = array<i32>} : memref<1x16x128xf32, #tpu.memory_space<vmem>>, vector<1x16x128xf32>,
    return
  }
  func.func @transform_0(%arg0: i32) -> (i32, i32, i32) {
    %c0_i32 = arith.constant 0 : i32
    %c0_i32_0 = arith.constant 0 : i32
    %c0_i32_1 = arith.constant 0 : i32
    return %arg0, %c0_i32, %c0_i32_0 : i32, i32, i32
  }
  func.func @transform_1(%arg0: i32) -> (i32, i32, i32) {
    %c0_i32 = arith.constant 0 : i32
    %c0_i32_0 = arith.constant 0 : i32
    %c0_i32_1 = arith.constant 0 : i32
    return %arg0, %c0_i32, %c0_i32_0 : i32, i32, i32
  }
  func.func @transform_2(%arg0: i32) -> (i32, i32, i32) {
    %c0_i32 = arith.constant 0 : i32
    %c0_i32_0 = arith.constant 0 : i32
    %c0_i32_1 = arith.constant 0 : i32
    return %arg0, %c0_i32, %c0_i32_0 : i32, i32, i32
  }
  func.func @transform_3(%arg0: i32) -> (i32, i32, i32) {
    %c0_i32 = arith.constant 0 : i32
    %c0_i32_0 = arith.constant 0 : i32
    %c0_i32_1 = arith.constant 0 : i32
    return %arg0, %c0_i32, %c0_i32_0 : i32, i32, i32
  }
  func.func @transform_4(%arg0: i32) -> (i32, i32, i32) {
    %c0_i32 = arith.constant 0 : i32
    %c0_i32_0 = arith.constant 0 : i32
    %c0_i32_1 = arith.constant 0 : i32
    return %arg0, %c0_i32, %c0_i32_0 : i32, i32, i32
  }
  func.func @transform_5(%arg0: i32) -> (i32, i32) {
    %c0_i32 = arith.constant 0 : i32
    %c0_i32_0 = arith.constant 0 : i32
    %c0_i32_1 = arith.constant 0 : i32
    return %c0_i32, %c0_i32_0 : i32, i32
  }
  func.func @transform_6(%arg0: i32) -> (i32, i32, i32) {
    %c0_i32 = arith.constant 0 : i32
    %c0_i32_0 = arith.constant 0 : i32
    %c0_i32_1 = arith.constant 0 : i32
    return %arg0, %c0_i32, %c0_i32_0 : i32, i32, i32
  }
}

</mosaic_0001>

<llo_original>
// kernel: gromov_wasserstein.1
$region0: #{gromov_wasserstein.1}
  #allocation0 [shape = 'u32[]', space=smem, size = 0x4, offset = 0x4, fixed_abs, tag = 'smem constant byte address 0x4 - core index']
  #allocation1 [shape = 'u32[144,128]{1,0:T(1,128)}', space=vmem, size = 0x12000, scoped, tag = 'internal scratch']
  %s0 = inlined_call_operand.vmem [shape: f32[2,16,128], index: 0, kind: input, shape index: {}]
  %s1 = inlined_call_operand.vmem [shape: f32[2,128,128], index: 1, kind: input, shape index: {}]
  %s2 = inlined_call_operand.vmem [shape: f32[2,16,128], index: 2, kind: input, shape index: {}]
  %s3 = inlined_call_operand.vmem [shape: f32[2,16,128], index: 3, kind: input, shape index: {}]
  %s4 = inlined_call_operand.vmem [shape: f32[2,1,128], index: 4, kind: input, shape index: {}]
  %s5 = inlined_call_operand.vmem [shape: f32[128,128], index: 5, kind: input, shape index: {}]
  %s6 = inlined_call_operand.vmem [shape: f32[2,16,128], index: 6, kind: output, shape index: {}]
  %s7 = sld [smem:[#allocation0]]
  $region64: #{gromov_wasserstein.1} parent=0
    _
  %s9 = ssub.s32 1, %s7
  %s10 = scalar_select 0, %s9, %s7
  loop: start=0, step=1, limit=4
  $region2: #{gromov_wasserstein.1} parent=0 // loop_pre_header
    _
  $region3: #{gromov_wasserstein.1} parent=0 // loop_header
    %s12 = sphi 0, %s16
    %p13 = scmp.ge.s32.totalorder %s12, 4
    %s22 = sphi 0, %s24
    %s25 = sphi 0, %s22
    %s26 = sphi 0, %s25
    %s42 = sphi 0, %s26
    %s48 = sphi 0, %s50
    %s51 = sphi 0, %s48
    %s52 = sphi 0, %s51
    %s68 = sphi 0, %s52
    %s74 = sphi 0, %s76
    %s77 = sphi 0, %s74
    %s78 = sphi 0, %s77
    %s94 = sphi 0, %s78
    %s100 = sphi 0, %s102
    %s103 = sphi 0, %s100
    %s104 = sphi 0, %s103
    %s120 = sphi 0, %s104
    %s126 = sphi 0, %s128
    %s129 = sphi 0, %s126
    %s130 = sphi 0, %s129
    %s146 = sphi 0, %s130
    %s150 = sphi 0, %s150
    %s152 = sphi 0, %s150
    %s153 = sphi 0, %s152
    %s167 = sphi 0, %s153
    %s173 = sphi 0, %s175
    %s176 = sphi 0, %s173
    %s177 = sphi 0, %s176
    %s193 = sphi 0, %s177
  $region4: #{gromov_wasserstein.1} parent=0 // loop_header_branch
    %15 = sbr.rel (%p13) target = $region8
  $region5: #{gromov_wasserstein.1} parent=0 // loop_body
    %s17 = ssub.s32 %s12, 1
    %s18 = ssub.s32 %s12, 2
    %s19 = sadd.s32 %s12, 1
    %s20 = ssub.s32 %s12, %s19
    %p21 = scmp.eq.s32.totalorder %s20, 0
    %s23 = sadd.s32 %s22, 1
    %s24 = scalar_select %p21, %s22, %s23
    %p27 = pneg %p21
    %p28 = scmp.eq.s32.totalorder %s12, 1
    %p29 = por %p27, %p28
    %p30 = scmp.ne.s32.totalorder %s22, %s25
    %p31 = scmp.eq.s32.totalorder %s12, 0
    %p32 = por %p30, %p31
    %p33 = scmp.ne.s32.totalorder %s22, %s25
    %p34 = scmp.eq.s32.totalorder %s17, 1
    %p35 = por %p33, %p34
    %p36 = scmp.ne.s32.totalorder %s25, %s26
    %p37 = scmp.eq.s32.totalorder %s17, 0
    %p38 = por %p36, %p37
    %p39 = scmp.ne.s32.totalorder %s25, %s26
    %p40 = scmp.eq.s32.totalorder %s18, 1
    %p41 = por %p39, %p40
    %p43 = scmp.ne.s32.totalorder %s26, %s42
    %p44 = scmp.eq.s32.totalorder %s18, 0
    %p45 = por %p43, %p44
    %s46 = ssub.s32 %s12, %s19
    %p47 = scmp.eq.s32.totalorder %s46, 0
    %s49 = sadd.s32 %s48, 1
    %s50 = scalar_select %p47, %s48, %s49
    %p53 = pneg %p47
    %p54 = scmp.eq.s32.totalorder %s12, 1
    %p55 = por %p53, %p54
    %p56 = scmp.ne.s32.totalorder %s48, %s51
    %p57 = scmp.eq.s32.totalorder %s12, 0
    %p58 = por %p56, %p57
    %p59 = scmp.ne.s32.totalorder %s48, %s51
    %p60 = scmp.eq.s32.totalorder %s17, 1
    %p61 = por %p59, %p60
    %p62 = scmp.ne.s32.totalorder %s51, %s52
    %p63 = scmp.eq.s32.totalorder %s17, 0
    %p64 = por %p62, %p63
    %p65 = scmp.ne.s32.totalorder %s51, %s52
    %p66 = scmp.eq.s32.totalorder %s18, 1
    %p67 = por %p65, %p66
    %p69 = scmp.ne.s32.totalorder %s52, %s68
    %p70 = scmp.eq.s32.totalorder %s18, 0
    %p71 = por %p69, %p70
    %s72 = ssub.s32 %s12, %s19
    %p73 = scmp.eq.s32.totalorder %s72, 0
    %s75 = sadd.s32 %s74, 1
    %s76 = scalar_select %p73, %s74, %s75
    %p79 = pneg %p73
    %p80 = scmp.eq.s32.totalorder %s12, 1
    %p81 = por %p79, %p80
    %p82 = scmp.ne.s32.totalorder %s74, %s77
    %p83 = scmp.eq.s32.totalorder %s12, 0
    %p84 = por %p82, %p83
    %p85 = scmp.ne.s32.totalorder %s74, %s77
    %p86 = scmp.eq.s32.totalorder %s17, 1
    %p87 = por %p85, %p86
    %p88 = scmp.ne.s32.totalorder %s77, %s78
    %p89 = scmp.eq.s32.totalorder %s17, 0
    %p90 = por %p88, %p89
    %p91 = scmp.ne.s32.totalorder %s77, %s78
    %p92 = scmp.eq.s32.totalorder %s18, 1
    %p93 = por %p91, %p92
    %p95 = scmp.ne.s32.totalorder %s78, %s94
    %p96 = scmp.eq.s32.totalorder %s18, 0
    %p97 = por %p95, %p96
    %s98 = ssub.s32 %s12, %s19
    %p99 = scmp.eq.s32.totalorder %s98, 0
    %s101 = sadd.s32 %s100, 1
    %s102 = scalar_select %p99, %s100, %s101
    %p105 = pneg %p99
    %p106 = scmp.eq.s32.totalorder %s12, 1
    %p107 = por %p105, %p106
    %p108 = scmp.ne.s32.totalorder %s100, %s103
    %p109 = scmp.eq.s32.totalorder %s12, 0
    %p110 = por %p108, %p109
    %p111 = scmp.ne.s32.totalorder %s100, %s103
    %p112 = scmp.eq.s32.totalorder %s17, 1
    %p113 = por %p111, %p112
    %p114 = scmp.ne.s32.totalorder %s103, %s104
    %p115 = scmp.eq.s32.totalorder %s17, 0
    %p116 = por %p114, %p115
    %p117 = scmp.ne.s32.totalorder %s103, %s104
    %p118 = scmp.eq.s32.totalorder %s18, 1
    %p119 = por %p117, %p118
    %p121 = scmp.ne.s32.totalorder %s104, %s120
    %p122 = scmp.eq.s32.totalorder %s18, 0
    %p123 = por %p121, %p122
    %s124 = ssub.s32 %s12, %s19
    %p125 = scmp.eq.s32.totalorder %s124, 0
    %s127 = sadd.s32 %s126, 1
    %s128 = scalar_select %p125, %s126, %s127
    %p131 = pneg %p125
    %p132 = scmp.eq.s32.totalorder %s12, 1
    %p133 = por %p131, %p132
    %p134 = scmp.ne.s32.totalorder %s126, %s129
    %p135 = scmp.eq.s32.totalorder %s12, 0
    %p136 = por %p134, %p135
    %p137 = scmp.ne.s32.totalorder %s126, %s129
    %p138 = scmp.eq.s32.totalorder %s17, 1
    %p139 = por %p137, %p138
    %p140 = scmp.ne.s32.totalorder %s129, %s130
    %p141 = scmp.eq.s32.totalorder %s17, 0
    %p142 = por %p140, %p141
    %p143 = scmp.ne.s32.totalorder %s129, %s130
    %p144 = scmp.eq.s32.totalorder %s18, 1
    %p145 = por %p143, %p144
    %p147 = scmp.ne.s32.totalorder %s130, %s146
    %p148 = scmp.eq.s32.totalorder %s18, 0
    %p149 = por %p147, %p148
    %s151 = sadd.s32 %s150, 1
    %p154 = scmp.eq.s32.totalorder %s12, 1
    %p155 = scmp.ne.s32.totalorder %s150, %s152
    %p156 = scmp.eq.s32.totalorder %s12, 0
    %p157 = por %p155, %p156
    %p158 = scmp.ne.s32.totalorder %s150, %s152
    %p159 = scmp.eq.s32.totalorder %s17, 1
    %p160 = por %p158, %p159
    %p161 = scmp.ne.s32.totalorder %s152, %s153
    %p162 = scmp.eq.s32.totalorder %s17, 0
    %p163 = por %p161, %p162
    %p164 = scmp.ne.s32.totalorder %s152, %s153
    %p165 = scmp.eq.s32.totalorder %s18, 1
    %p166 = por %p164, %p165
    %p168 = scmp.ne.s32.totalorder %s153, %s167
    %p169 = scmp.eq.s32.totalorder %s18, 0
    %p170 = por %p168, %p169
    %s171 = ssub.s32 %s12, %s19
    %p172 = scmp.eq.s32.totalorder %s171, 0
    %s174 = sadd.s32 %s173, 1
    %s175 = scalar_select %p172, %s173, %s174
    %p178 = pneg %p172
    %p179 = scmp.eq.s32.totalorder %s12, 1
    %p180 = por %p178, %p179
    %p181 = scmp.ne.s32.totalorder %s173, %s176
    %p182 = scmp.eq.s32.totalorder %s12, 0
    %p183 = por %p181, %p182
    %p184 = scmp.ne.s32.totalorder %s173, %s176
    %p185 = scmp.eq.s32.totalorder %s17, 1
    %p186 = por %p184, %p185
    %p187 = scmp.ne.s32.totalorder %s176, %s177
    %p188 = scmp.eq.s32.totalorder %s17, 0
    %p189 = por %p187, %p188
    %p190 = scmp.ne.s32.totalorder %s176, %s177
    %p191 = scmp.eq.s32.totalorder %s18, 1
    %p192 = por %p190, %p191
    %p194 = scmp.ne.s32.totalorder %s177, %s193
    %p195 = scmp.eq.s32.totalorder %s18, 0
    %p196 = por %p194, %p195
    %p197 = scmp.le.s32.totalorder 1, %s12
    %p198 = scmp.lt.s32.totalorder %s12, 3
    %p199 = pnand %p197, %p198
    %p200 = pneg %p199
    // Predicated region
    $region9: #{gromov_wasserstein.1} parent=5 // pred_check
      _
    $region10: #{gromov_wasserstein.1} parent=5 // pred_check_branch
      %202 = sbr.rel (%p199) target = $region12
    $region11: #{gromov_wasserstein.1} parent=5 // pred_region
      %s203 = ssub.s32 %s12, 1
      // Predicated region
      $region13: #{gromov_wasserstein.1} parent=11 // pred_check
        %p204 = pneg %p163
      $region14: #{gromov_wasserstein.1} parent=11 // pred_check_branch
        %206 = sbr.rel (%p204) target = $region16
      $region15: #{gromov_wasserstein.1} parent=11 // pred_region
        _
      $region16: #{gromov_wasserstein.1} parent=11 // pred_fallthru
        _
    $region12: #{gromov_wasserstein.1} parent=5 // pred_fallthru
      _
    %p207 = scmp.lt.s32.totalorder %s12, 2
    // Predicated region
    $region17: #{gromov_wasserstein.1} parent=5 // pred_check
      %p208 = pneg %p207
    $region18: #{gromov_wasserstein.1} parent=5 // pred_check_branch
      %210 = sbr.rel (%p208) target = $region20
    $region19: #{gromov_wasserstein.1} parent=5 // pred_region
      // Predicated region
      $region21: #{gromov_wasserstein.1} parent=19 // pred_check
        %p211 = pneg %p32
      $region22: #{gromov_wasserstein.1} parent=19 // pred_check_branch
        %213 = sbr.rel (%p211) target = $region24
      $region23: #{gromov_wasserstein.1} parent=19 // pred_region
        %p214 = scmp.lt.s32.totalorder %s12, 1
        %s215 = scalar_select %p214, %s12, 1
        %s216 = smul.addr %s215, 2
        %s217 = smul.addr %s216, 8
        %s218 = scalar_lea.vmem %s0, %s217
      $region24: #{gromov_wasserstein.1} parent=19 // pred_fallthru
        _
      // Predicated region
      $region25: #{gromov_wasserstein.1} parent=19 // pred_check
        %p219 = pneg %p58
      $region26: #{gromov_wasserstein.1} parent=19 // pred_check_branch
        %221 = sbr.rel (%p219) target = $region28
      $region27: #{gromov_wasserstein.1} parent=19 // pred_region
        %p222 = scmp.lt.s32.totalorder %s12, 1
        %s223 = scalar_select %p222, %s12, 1
        %s224 = smul.addr %s223, 16
        %s225 = smul.addr %s224, 8
        %s226 = scalar_lea.vmem %s1, %s225
      $region28: #{gromov_wasserstein.1} parent=19 // pred_fallthru
        _
      // Predicated region
      $region29: #{gromov_wasserstein.1} parent=19 // pred_check
        %p227 = pneg %p84
      $region30: #{gromov_wasserstein.1} parent=19 // pred_check_branch
        %229 = sbr.rel (%p227) target = $region32
      $region31: #{gromov_wasserstein.1} parent=19 // pred_region
        %p230 = scmp.lt.s32.totalorder %s12, 1
        %s231 = scalar_select %p230, %s12, 1
        %s232 = smul.addr %s231, 2
        %s233 = smul.addr %s232, 8
        %s234 = scalar_lea.vmem %s2, %s233
      $region32: #{gromov_wasserstein.1} parent=19 // pred_fallthru
        _
      // Predicated region
      $region33: #{gromov_wasserstein.1} parent=19 // pred_check
        %p235 = pneg %p110
      $region34: #{gromov_wasserstein.1} parent=19 // pred_check_branch
        %237 = sbr.rel (%p235) target = $region36
      $region35: #{gromov_wasserstein.1} parent=19 // pred_region
        %p238 = scmp.lt.s32.totalorder %s12, 1
        %s239 = scalar_select %p238, %s12, 1
        %s240 = smul.addr %s239, 2
        %s241 = smul.addr %s240, 8
        %s242 = scalar_lea.vmem %s3, %s241
      $region36: #{gromov_wasserstein.1} parent=19 // pred_fallthru
        _
      // Predicated region
      $region37: #{gromov_wasserstein.1} parent=19 // pred_check
        %p243 = pneg %p136
      $region38: #{gromov_wasserstein.1} parent=19 // pred_check_branch
        %245 = sbr.rel (%p243) target = $region40
      $region39: #{gromov_wasserstein.1} parent=19 // pred_region
        %p246 = scmp.lt.s32.totalorder %s12, 1
        %s247 = scalar_select %p246, %s12, 1
        %s248 = scalar_lea.vmem %s4, %s247
      $region40: #{gromov_wasserstein.1} parent=19 // pred_fallthru
        _
    $region20: #{gromov_wasserstein.1} parent=5 // pred_fallthru
      _
    %p249 = scmp.le.s32.totalorder 1, %s12
    %p250 = scmp.lt.s32.totalorder %s12, 3
    %p251 = pnand %p249, %p250
    %p252 = pneg %p251
    // Predicated region
    $region41: #{gromov_wasserstein.1} parent=5 // pred_check
      _
    $region42: #{gromov_wasserstein.1} parent=5 // pred_check_branch
      %254 = sbr.rel (%p251) target = $region44
    $region43: #{gromov_wasserstein.1} parent=5 // pred_region
      %s255 = ssub.s32 %s12, 1
      %p256 = scmp.lt.s32.totalorder %s17, 1
      %s257 = scalar_select %p256, %s17, 1
      %s258 = smul.addr %s257, 2
      %s259 = smul.addr %s258, 8
      %s260 = scalar_lea.vmem %s0, %s259
      %p261 = pneg %p38
      %p262 = pneg %p35
      %p263 = scmp.lt.s32.totalorder %s17, 1
      %s264 = scalar_select %p263, %s17, 1
      %s265 = smul.addr %s264, 16
      %s266 = smul.addr %s265, 8
      %s267 = scalar_lea.vmem %s1, %s266
      %p268 = pneg %p64
      %p269 = pneg %p61
      %p270 = scmp.lt.s32.totalorder %s17, 1
      %s271 = scalar_select %p270, %s17, 1
      %s272 = smul.addr %s271, 2
      %s273 = smul.addr %s272, 8
      %s274 = scalar_lea.vmem %s2, %s273
      %p275 = pneg %p90
      %p276 = pneg %p87
      %p277 = scmp.lt.s32.totalorder %s17, 1
      %s278 = scalar_select %p277, %s17, 1
      %s279 = smul.addr %s278, 2
      %s280 = smul.addr %s279, 8
      %s281 = scalar_lea.vmem %s3, %s280
      %p282 = pneg %p116
      %p283 = pneg %p113
      %p284 = scmp.lt.s32.totalorder %s17, 1
      %s285 = scalar_select %p284, %s17, 1
      %s286 = scalar_lea.vmem %s4, %s285
      %p287 = pneg %p142
      %p288 = pneg %p139
      %p289 = pneg %p163
      %p290 = pneg %p160
      %p291 = pneg %p189
      %p292 = pneg %p186
      %p293 = scmp.lt.s32.totalorder %s17, 1
      %s294 = scalar_select %p293, %s17, 1
      %s295 = smul.addr %s294, 2
      %s296 = smul.addr %s295, 8
      %s297 = scalar_lea.vmem %s6, %s296
      %p298 = scmp.lt.s32.totalorder %s17, 1
      %s299 = scalar_select %p298, %s17, 1
      %s300 = smul.addr %s299, 2
      %s301 = smul.addr %s300, 8
      %s302 = scalar_lea.vmem %s0, %s301
      %p303 = scmp.lt.s32.totalorder %s17, 1
      %s304 = scalar_select %p303, %s17, 1
      %s305 = smul.addr %s304, 16
      %s306 = smul.addr %s305, 8
      %s307 = scalar_lea.vmem %s1, %s306
      %p308 = scmp.lt.s32.totalorder %s17, 1
      %s309 = scalar_select %p308, %s17, 1
      %s310 = smul.addr %s309, 2
      %s311 = smul.addr %s310, 8
      %s312 = scalar_lea.vmem %s2, %s311
      %p313 = scmp.lt.s32.totalorder %s17, 1
      %s314 = scalar_select %p313, %s17, 1
      %s315 = smul.addr %s314, 2
      %s316 = smul.addr %s315, 8
      %s317 = scalar_lea.vmem %s3, %s316
      %p318 = scmp.lt.s32.totalorder %s17, 1
      %s319 = scalar_select %p318, %s17, 1
      %s320 = scalar_lea.vmem %s4, %s319
      %p321 = scmp.lt.s32.totalorder %s17, 1
      %s322 = scalar_select %p321, %s17, 1
      %s323 = smul.addr %s322, 2
      %s324 = smul.addr %s323, 8
      %s325 = scalar_lea.vmem %s6, %s324
      %v326 = vld [vmem:[%s317] sm:$0xff]
      %v327 = vld [vmem:[%s317 + $0x8] sm:$0xff]
      %v328 = vld [vmem:[%s320] sm:$0x1]
      %v330 = vlaneseq
      %v331 = vshrl.u32 %v330, 7
      %v332 = vsub.s32 0, %v331
      %v333 = vrot.slane %v328, %v332
      %v335 = vmul.f32 %v326, %v333
      %v336 = vmul.f32 %v327, %v333
      loop: start=0, step=1, limit=15
      $region45: #{gromov_wasserstein.1} parent=43 // loop_pre_header
        _
      $region46: #{gromov_wasserstein.1} parent=43 // loop_header
        %s338 = sphi 0, %s342
        %p339 = scmp.ge.s32.totalorder %s338, 15
        %v343 = vphi %v335, %v2050
        %v344 = vphi %v336, %v2051
      $region47: #{gromov_wasserstein.1} parent=43 // loop_header_branch
        %341 = sbr.rel (%p339) target = $region51
      $region48: #{gromov_wasserstein.1} parent=43 // loop_body
        %v345 = vld [vmem:[%s5] sm:$0xff]
        %v346 = vld [vmem:[%s5 + $0x8] sm:$0xff]
        %v347 = vld [vmem:[%s5 + $0x10] sm:$0xff]
        %v348 = vld [vmem:[%s5 + $0x18] sm:$0xff]
        %v349 = vld [vmem:[%s5 + $0x20] sm:$0xff]
        %v350 = vld [vmem:[%s5 + $0x28] sm:$0xff]
        %v351 = vld [vmem:[%s5 + $0x30] sm:$0xff]
        %v352 = vld [vmem:[%s5 + $0x38] sm:$0xff]
        %v353 = vld [vmem:[%s5 + $0x40] sm:$0xff]
        %v354 = vld [vmem:[%s5 + $0x48] sm:$0xff]
        %v355 = vld [vmem:[%s5 + $0x50] sm:$0xff]
        %v356 = vld [vmem:[%s5 + $0x58] sm:$0xff]
        %v357 = vld [vmem:[%s5 + $0x60] sm:$0xff]
        %v358 = vld [vmem:[%s5 + $0x68] sm:$0xff]
        %v359 = vld [vmem:[%s5 + $0x70] sm:$0xff]
        %v360 = vld [vmem:[%s5 + $0x78] sm:$0xff]
        %v361 = vmul.f32 %v343, %v345
        %v362 = vmul.f32 %v344, %v346
        %v363 = vmul.f32 %v343, %v347
        %v364 = vmul.f32 %v344, %v348
        %v365 = vmul.f32 %v343, %v349
        %v366 = vmul.f32 %v344, %v350
        %v367 = vmul.f32 %v343, %v351
        %v368 = vmul.f32 %v344, %v352
        %v369 = vmul.f32 %v343, %v353
        %v370 = vmul.f32 %v344, %v354
        %v371 = vmul.f32 %v343, %v355
        %v372 = vmul.f32 %v344, %v356
        %v373 = vmul.f32 %v343, %v357
        %v374 = vmul.f32 %v344, %v358
        %v375 = vmul.f32 %v343, %v359
        %v376 = vmul.f32 %v344, %v360
        %v377 = vld [vmem:[%s302] sm:$0xff]
        %v378 = vld [vmem:[%s302 + $0x8] sm:$0xff]
        %379 = vmatprep.subr.mxu0 0.0
        %380 = vmatpush1.msra.mxu0 %v376
        %381 = vmatprep.subr.mxu0 0.0
        %382 = vmatpush1.msra.mxu0 %v375
        %383 = vmatprep.subr.mxu0 0.0
        %384 = vmatpush1.msra.mxu0 %v374
        %385 = vmatprep.subr.mxu0 0.0
        %386 = vmatpush1.msra.mxu0 %v373
        %387 = vmatprep.subr.mxu0 0.0
        %388 = vmatpush1.msra.mxu0 %v372
        %389 = vmatprep.subr.mxu0 0.0
        %390 = vmatpush1.msra.mxu0 %v371
        %391 = vmatprep.subr.mxu0 0.0
        %392 = vmatpush1.msra.mxu0 %v370
        %393 = vmatprep.subr.mxu0 0.0
        %394 = vmatpush1.msra.mxu0 %v369
        %395 = vmatprep.subr.mxu0 0.0
        %396 = vmatpush1.msra.mxu0 %v368
        %397 = vmatprep.subr.mxu0 0.0
        %398 = vmatpush1.msra.mxu0 %v367
        %399 = vmatprep.subr.mxu0 0.0
        %400 = vmatpush1.msra.mxu0 %v366
        %401 = vmatprep.subr.mxu0 0.0
        %402 = vmatpush1.msra.mxu0 %v365
        %403 = vmatprep.subr.mxu0 0.0
        %404 = vmatpush1.msra.mxu0 %v364
        %405 = vmatprep.subr.mxu0 0.0
        %406 = vmatpush1.msra.mxu0 %v363
        %407 = vmatprep.subr.mxu0 0.0
        %408 = vmatpush1.msra.mxu0 %v362
        %409 = vmatprep.subr.mxu0 0.0
        %410 = vmatpush1.msra.mxu0 %v361
        %411 = vmatprep.subr.mxu0 0.0
        %412 = vmatpush2.msra.mxu0 0.0
        %413 = vmatprep.subr.mxu0 0.0
        %414 = vmatpush2.msra.mxu0 0.0
        %415 = vmatprep.subr.mxu0 0.0
        %416 = vmatpush2.msra.mxu0 0.0
        %417 = vmatprep.subr.mxu0 0.0
        %418 = vmatpush2.msra.mxu0 0.0
        %419 = vmatprep.subr.mxu0 0.0
        %420 = vmatpush2.msra.mxu0 0.0
        %421 = vmatprep.subr.mxu0 0.0
        %422 = vmatpush2.msra.mxu0 0.0
        %423 = vmatprep.subr.mxu0 0.0
        %424 = vmatpush2.msra.mxu0 0.0
        %425 = vmatprep.subr.mxu0 0.0
        %426 = vmatpush2.msra.mxu0 0.0
        %427 = vmatprep.subr.mxu0 0.0
        %428 = vmatpush2.msra.mxu0 0.0
        %429 = vmatprep.subr.mxu0 0.0
        %430 = vmatpush2.msra.mxu0 0.0
        %431 = vmatprep.subr.mxu0 0.0
        %432 = vmatpush2.msra.mxu0 0.0
        %433 = vmatprep.subr.mxu0 0.0
        %434 = vmatpush2.msra.mxu0 0.0
        %435 = vmatprep.subr.mxu0 0.0
        %436 = vmatpush2.msra.mxu0 0.0
        %437 = vmatprep.subr.mxu0 0.0
        %438 = vmatpush2.msra.mxu0 0.0
        %439 = vmatprep.subr.mxu0 0.0
        %440 = vmatpush2.msra.mxu0 0.0
        %441 = vmatprep.subr.mxu0 0.0
        %442 = vmatpush2.msra.mxu0 0.0
        %443 = vmatprep.mubr.f32.mxu0 0.0
        %444 = vmatmul.mubr.f32.gmra.mxu0 %v377
        %v445 = vpop.f32.mrf.mxu0
        %v446 = vadd.f32 0.0, %v445
        %v447 = vpop.f32.mrf.mxu0
        %448 = vmatprep.mubr.f32.mxu0 0.0
        %449 = vmatmul.mubr.f32.gmra.mxu0 %v378
        %v450 = vpop.f32.mrf.mxu0
        %v451 = vadd.f32 0.0, %v450
        %v452 = vpop.f32.mrf.mxu0
        %453 = vdwg.mxu0
        %v454 = vld [vmem:[%s307] sm:$0xff]
        %v455 = vld [vmem:[%s307 + $0x8] sm:$0xff]
        %v456 = vld [vmem:[%s307 + $0x10] sm:$0xff]
        %v457 = vld [vmem:[%s307 + $0x18] sm:$0xff]
        %v458 = vld [vmem:[%s307 + $0x20] sm:$0xff]
        %v459 = vld [vmem:[%s307 + $0x28] sm:$0xff]
        %v460 = vld [vmem:[%s307 + $0x30] sm:$0xff]
        %v461 = vld [vmem:[%s307 + $0x38] sm:$0xff]
        %v462 = vld [vmem:[%s307 + $0x40] sm:$0xff]
        %v463 = vld [vmem:[%s307 + $0x48] sm:$0xff]
        %v464 = vld [vmem:[%s307 + $0x50] sm:$0xff]
        %v465 = vld [vmem:[%s307 + $0x58] sm:$0xff]
        %v466 = vld [vmem:[%s307 + $0x60] sm:$0xff]
        %v467 = vld [vmem:[%s307 + $0x68] sm:$0xff]
        %v468 = vld [vmem:[%s307 + $0x70] sm:$0xff]
        %v469 = vld [vmem:[%s307 + $0x78] sm:$0xff]
        %470 = vmatprep.subr.mxu0 0.0
        %471 = vmatpush1.msra.mxu0 %v469
        %472 = vmatprep.subr.mxu0 0.0
        %473 = vmatpush1.msra.mxu0 %v468
        %474 = vmatprep.subr.mxu0 0.0
        %475 = vmatpush1.msra.mxu0 %v467
        %476 = vmatprep.subr.mxu0 0.0
        %477 = vmatpush1.msra.mxu0 %v466
        %478 = vmatprep.subr.mxu0 0.0
        %479 = vmatpush1.msra.mxu0 %v465
        %480 = vmatprep.subr.mxu0 0.0
        %481 = vmatpush1.msra.mxu0 %v464
        %482 = vmatprep.subr.mxu0 0.0
        %483 = vmatpush1.msra.mxu0 %v463
        %484 = vmatprep.subr.mxu0 0.0
        %485 = vmatpush1.msra.mxu0 %v462
        %486 = vmatprep.subr.mxu0 0.0
        %487 = vmatpush1.msra.mxu0 %v461
        %488 = vmatprep.subr.mxu0 0.0
        %489 = vmatpush1.msra.mxu0 %v460
        %490 = vmatprep.subr.mxu0 0.0
        %491 = vmatpush1.msra.mxu0 %v459
        %492 = vmatprep.subr.mxu0 0.0
        %493 = vmatpush1.msra.mxu0 %v458
        %494 = vmatprep.subr.mxu0 0.0
        %495 = vmatpush1.msra.mxu0 %v457
        %496 = vmatprep.subr.mxu0 0.0
        %497 = vmatpush1.msra.mxu0 %v456
        %498 = vmatprep.subr.mxu0 0.0
        %499 = vmatpush1.msra.mxu0 %v455
        %500 = vmatprep.subr.mxu0 0.0
        %501 = vmatpush1.msra.mxu0 %v454
        %502 = vmatprep.subr.mxu0 0.0
        %503 = vmatpush2.msra.mxu0 0.0
        %504 = vmatprep.subr.mxu0 0.0
        %505 = vmatpush2.msra.mxu0 0.0
        %506 = vmatprep.subr.mxu0 0.0
        %507 = vmatpush2.msra.mxu0 0.0
        %508 = vmatprep.subr.mxu0 0.0
        %509 = vmatpush2.msra.mxu0 0.0
        %510 = vmatprep.subr.mxu0 0.0
        %511 = vmatpush2.msra.mxu0 0.0
        %512 = vmatprep.subr.mxu0 0.0
        %513 = vmatpush2.msra.mxu0 0.0
        %514 = vmatprep.subr.mxu0 0.0
        %515 = vmatpush2.msra.mxu0 0.0
        %516 = vmatprep.subr.mxu0 0.0
        %517 = vmatpush2.msra.mxu0 0.0
        %518 = vmatprep.subr.mxu0 0.0
        %519 = vmatpush2.msra.mxu0 0.0
        %520 = vmatprep.subr.mxu0 0.0
        %521 = vmatpush2.msra.mxu0 0.0
        %522 = vmatprep.subr.mxu0 0.0
        %523 = vmatpush2.msra.mxu0 0.0
        %524 = vmatprep.subr.mxu0 0.0
        %525 = vmatpush2.msra.mxu0 0.0
        %526 = vmatprep.subr.mxu0 0.0
        %527 = vmatpush2.msra.mxu0 0.0
        %528 = vmatprep.subr.mxu0 0.0
        %529 = vmatpush2.msra.mxu0 0.0
        %530 = vmatprep.subr.mxu0 0.0
        %531 = vmatpush2.msra.mxu0 0.0
        %532 = vmatprep.subr.mxu0 0.0
        %533 = vmatpush2.msra.mxu0 0.0
        %534 = vmatprep.mubr.f32.mxu0 0.0
        %535 = vmatmul.mubr.f32.gmra.mxu0 %v446
        %v536 = vpop.f32.mrf.mxu0
        %v537 = vadd.f32 0.0, %v536
        %v538 = vpop.f32.mrf.mxu0
        %539 = vmatprep.mubr.f32.mxu0 0.0
        %540 = vmatmul.mubr.f32.gmra.mxu0 %v451
        %v541 = vpop.f32.mrf.mxu0
        %v542 = vadd.f32 0.0, %v541
        %v543 = vpop.f32.mrf.mxu0
        %544 = vdwg.mxu0
        %v545 = vld [vmem:[%s312] sm:$0xff]
        %v546 = vld [vmem:[%s312 + $0x8] sm:$0xff]
        %v547 = vmul.f32 %v537, 2.0
        %v548 = vmul.f32 %v542, 2.0
        %v549 = vsub.f32 %v545, %v547
        %v550 = vsub.f32 %v546, %v548
        %551 = vmin.xlane.f32.xlu0 %v549
        %v552 = vpop.xlane.xlu0 %551
        %553 = vmin.xlane.f32.xlu0 %v550
        %v554 = vpop.xlane.xlu0 %553
        %v555 = vsub.f32 %v549, %v552
        %v556 = vsub.f32 %v550, %v554
        %v557 = vsub.f32 0.0, %v555
        %v558 = vsub.f32 0.0, %v556
        %v559 = vmul.f32 %v557, 10.0
        %v560 = vmul.f32 %v558, 10.0
        %v561 = vmul.f32 %v559, 1.442695
        %v562 = vpow.pop %v561
        %v563 = vmul.f32 %v560, 1.442695
        %v564 = vpow.pop %v563
        %v565 = vmul.f32 %v562, %v343
        %v566 = vmul.f32 %v564, %v344
        %567 = vmatprep.subr.mxu0 0.0
        %568 = vmatpush1.msra.mxu0 %v360
        %569 = vmatprep.subr.mxu0 0.0
        %570 = vmatpush1.msra.mxu0 %v359
        %571 = vmatprep.subr.mxu0 0.0
        %572 = vmatpush1.msra.mxu0 %v358
        %573 = vmatprep.subr.mxu0 0.0
        %574 = vmatpush1.msra.mxu0 %v357
        %575 = vmatprep.subr.mxu0 0.0
        %576 = vmatpush1.msra.mxu0 %v356
        %577 = vmatprep.subr.mxu0 0.0
        %578 = vmatpush1.msra.mxu0 %v355
        %579 = vmatprep.subr.mxu0 0.0
        %580 = vmatpush1.msra.mxu0 %v354
        %581 = vmatprep.subr.mxu0 0.0
        %582 = vmatpush1.msra.mxu0 %v353
        %583 = vmatprep.subr.mxu0 0.0
        %584 = vmatpush1.msra.mxu0 %v352
        %585 = vmatprep.subr.mxu0 0.0
        %586 = vmatpush1.msra.mxu0 %v351
        %587 = vmatprep.subr.mxu0 0.0
        %588 = vmatpush1.msra.mxu0 %v350
        %589 = vmatprep.subr.mxu0 0.0
        %590 = vmatpush1.msra.mxu0 %v349
        %591 = vmatprep.subr.mxu0 0.0
        %592 = vmatpush1.msra.mxu0 %v348
        %593 = vmatprep.subr.mxu0 0.0
        %594 = vmatpush1.msra.mxu0 %v347
        %595 = vmatprep.subr.mxu0 0.0
        %596 = vmatpush1.msra.mxu0 %v346
        %597 = vmatprep.subr.mxu0 0.0
        %598 = vmatpush1.msra.mxu0 %v345
        %599 = vmatprep.subr.mxu0 0.0
        %600 = vmatpush2.msra.mxu0 0.0
        %601 = vmatprep.subr.mxu0 0.0
        %602 = vmatpush2.msra.mxu0 0.0
        %603 = vmatprep.subr.mxu0 0.0
        %604 = vmatpush2.msra.mxu0 0.0
        %605 = vmatprep.subr.mxu0 0.0
        %606 = vmatpush2.msra.mxu0 0.0
        %607 = vmatprep.subr.mxu0 0.0
        %608 = vmatpush2.msra.mxu0 0.0
        %609 = vmatprep.subr.mxu0 0.0
        %610 = vmatpush2.msra.mxu0 0.0
        %611 = vmatprep.subr.mxu0 0.0
        %612 = vmatpush2.msra.mxu0 0.0
        %613 = vmatprep.subr.mxu0 0.0
        %614 = vmatpush2.msra.mxu0 0.0
        %615 = vmatprep.subr.mxu0 0.0
        %616 = vmatpush2.msra.mxu0 0.0
        %617 = vmatprep.subr.mxu0 0.0
        %618 = vmatpush2.msra.mxu0 0.0
        %619 = vmatprep.subr.mxu0 0.0
        %620 = vmatpush2.msra.mxu0 0.0
        %621 = vmatprep.subr.mxu0 0.0
        %622 = vmatpush2.msra.mxu0 0.0
        %623 = vmatprep.subr.mxu0 0.0
        %624 = vmatpush2.msra.mxu0 0.0
        %625 = vmatprep.subr.mxu0 0.0
        %626 = vmatpush2.msra.mxu0 0.0
        %627 = vmatprep.subr.mxu0 0.0
        %628 = vmatpush2.msra.mxu0 0.0
        %629 = vmatprep.subr.mxu0 0.0
        %630 = vmatpush2.msra.mxu0 0.0
        %631 = vmatprep.mubr.f32.mxu0 0.0
        %632 = vmatmul.mubr.f32.gmra.mxu0 %v565
        %v633 = vpop.f32.mrf.mxu0
        %v634 = vadd.f32 1e-30, %v633
        %v635 = vpop.f32.mrf.mxu0
        %636 = vmatprep.mubr.f32.mxu0 0.0
        %637 = vmatmul.mubr.f32.gmra.mxu0 %v566
        %v638 = vpop.f32.mrf.mxu0
        %v639 = vadd.f32 1e-30, %v638
        %v640 = vpop.f32.mrf.mxu0
        %641 = vdwg.mxu0
        %v642 = vrcp.pop %v634
        %v643 = vrcp.pop %v639
        %v644 = vmul.f32 %v326, %v642
        %v645 = vmul.f32 %v327, %v643
        %v646 = vmul.f32 %v565, %v644
        %v647 = vmul.f32 %v566, %v645
        %v648 = vadd.f32 %v646, %v647
        %v649 = vrot.slane %v648, 4
        %v650 = vadd.f32 %v648, %v649
        %v651 = vrot.slane %v650, 2
        %v652 = vadd.f32 %v650, %v651
        %v653 = vrot.slane %v652, 1
        %v654 = vadd.f32 %v652, %v653
        %v655 = vadd.f32 %v654, 1e-30
        %v656 = vrcp.pop %v655
        %v657 = vmul.f32 %v328, %v656
        %v659 = vlaneseq
        %v660 = vshrl.u32 %v659, 7
        %v661 = vsub.s32 0, %v660
        %v662 = vrot.slane %v657, %v661
        %v664 = vmul.f32 %v565, %v662
        %v665 = vmul.f32 %v566, %v662
        %666 = vmatprep.subr.mxu0 0.0
        %667 = vmatpush1.msra.mxu0 %v360
        %668 = vmatprep.subr.mxu0 0.0
        %669 = vmatpush1.msra.mxu0 %v359
        %670 = vmatprep.subr.mxu0 0.0
        %671 = vmatpush1.msra.mxu0 %v358
        %672 = vmatprep.subr.mxu0 0.0
        %673 = vmatpush1.msra.mxu0 %v357
        %674 = vmatprep.subr.mxu0 0.0
        %675 = vmatpush1.msra.mxu0 %v356
        %676 = vmatprep.subr.mxu0 0.0
        %677 = vmatpush1.msra.mxu0 %v355
        %678 = vmatprep.subr.mxu0 0.0
        %679 = vmatpush1.msra.mxu0 %v354
        %680 = vmatprep.subr.mxu0 0.0
        %681 = vmatpush1.msra.mxu0 %v353
        %682 = vmatprep.subr.mxu0 0.0
        %683 = vmatpush1.msra.mxu0 %v352
        %684 = vmatprep.subr.mxu0 0.0
        %685 = vmatpush1.msra.mxu0 %v351
        %686 = vmatprep.subr.mxu0 0.0
        %687 = vmatpush1.msra.mxu0 %v350
        %688 = vmatprep.subr.mxu0 0.0
        %689 = vmatpush1.msra.mxu0 %v349
        %690 = vmatprep.subr.mxu0 0.0
        %691 = vmatpush1.msra.mxu0 %v348
        %692 = vmatprep.subr.mxu0 0.0
        %693 = vmatpush1.msra.mxu0 %v347
        %694 = vmatprep.subr.mxu0 0.0
        %695 = vmatpush1.msra.mxu0 %v346
        %696 = vmatprep.subr.mxu0 0.0
        %697 = vmatpush1.msra.mxu0 %v345
        %698 = vmatprep.subr.mxu0 0.0
        %699 = vmatpush2.msra.mxu0 0.0
        %700 = vmatprep.subr.mxu0 0.0
        %701 = vmatpush2.msra.mxu0 0.0
        %702 = vmatprep.subr.mxu0 0.0
        %703 = vmatpush2.msra.mxu0 0.0
        %704 = vmatprep.subr.mxu0 0.0
        %705 = vmatpush2.msra.mxu0 0.0
        %706 = vmatprep.subr.mxu0 0.0
        %707 = vmatpush2.msra.mxu0 0.0
        %708 = vmatprep.subr.mxu0 0.0
        %709 = vmatpush2.msra.mxu0 0.0
        %710 = vmatprep.subr.mxu0 0.0
        %711 = vmatpush2.msra.mxu0 0.0
        %712 = vmatprep.subr.mxu0 0.0
        %713 = vmatpush2.msra.mxu0 0.0
        %714 = vmatprep.subr.mxu0 0.0
        %715 = vmatpush2.msra.mxu0 0.0
        %716 = vmatprep.subr.mxu0 0.0
        %717 = vmatpush2.msra.mxu0 0.0
        %718 = vmatprep.subr.mxu0 0.0
        %719 = vmatpush2.msra.mxu0 0.0
        %720 = vmatprep.subr.mxu0 0.0
        %721 = vmatpush2.msra.mxu0 0.0
        %722 = vmatprep.subr.mxu0 0.0
        %723 = vmatpush2.msra.mxu0 0.0
        %724 = vmatprep.subr.mxu0 0.0
        %725 = vmatpush2.msra.mxu0 0.0
        %726 = vmatprep.subr.mxu0 0.0
        %727 = vmatpush2.msra.mxu0 0.0
        %728 = vmatprep.subr.mxu0 0.0
        %729 = vmatpush2.msra.mxu0 0.0
        %730 = vmatprep.mubr.f32.mxu0 0.0
        %731 = vmatmul.mubr.f32.gmra.mxu0 %v664
        %v732 = vpop.f32.mrf.mxu0
        %v733 = vadd.f32 1e-30, %v732
        %v734 = vpop.f32.mrf.mxu0
        %735 = vmatprep.mubr.f32.mxu0 0.0
        %736 = vmatmul.mubr.f32.gmra.mxu0 %v665
        %v737 = vpop.f32.mrf.mxu0
        %v738 = vadd.f32 1e-30, %v737
        %v739 = vpop.f32.mrf.mxu0
        %740 = vdwg.mxu0
        %v741 = vrcp.pop %v733
        %v742 = vrcp.pop %v738
        %v743 = vmul.f32 %v326, %v741
        %v744 = vmul.f32 %v327, %v742
        %v745 = vmul.f32 %v565, %v743
        %v746 = vmul.f32 %v566, %v744
        %v747 = vadd.f32 %v745, %v746
        %v748 = vrot.slane %v747, 4
        %v749 = vadd.f32 %v747, %v748
        %v750 = vrot.slane %v749, 2
        %v751 = vadd.f32 %v749, %v750
        %v752 = vrot.slane %v751, 1
        %v753 = vadd.f32 %v751, %v752
        %v754 = vadd.f32 %v753, 1e-30
        %v755 = vrcp.pop %v754
        %v756 = vmul.f32 %v328, %v755
        %v758 = vlaneseq
        %v759 = vshrl.u32 %v758, 7
        %v760 = vsub.s32 0, %v759
        %v761 = vrot.slane %v756, %v760
        %v763 = vmul.f32 %v565, %v761
        %v764 = vmul.f32 %v566, %v761
        %765 = vmatprep.subr.mxu0 0.0
        %766 = vmatpush1.msra.mxu0 %v360
        %767 = vmatprep.subr.mxu0 0.0
        %768 = vmatpush1.msra.mxu0 %v359
        %769 = vmatprep.subr.mxu0 0.0
        %770 = vmatpush1.msra.mxu0 %v358
        %771 = vmatprep.subr.mxu0 0.0
        %772 = vmatpush1.msra.mxu0 %v357
        %773 = vmatprep.subr.mxu0 0.0
        %774 = vmatpush1.msra.mxu0 %v356
        %775 = vmatprep.subr.mxu0 0.0
        %776 = vmatpush1.msra.mxu0 %v355
        %777 = vmatprep.subr.mxu0 0.0
        %778 = vmatpush1.msra.mxu0 %v354
        %779 = vmatprep.subr.mxu0 0.0
        %780 = vmatpush1.msra.mxu0 %v353
        %781 = vmatprep.subr.mxu0 0.0
        %782 = vmatpush1.msra.mxu0 %v352
        %783 = vmatprep.subr.mxu0 0.0
        %784 = vmatpush1.msra.mxu0 %v351
        %785 = vmatprep.subr.mxu0 0.0
        %786 = vmatpush1.msra.mxu0 %v350
        %787 = vmatprep.subr.mxu0 0.0
        %788 = vmatpush1.msra.mxu0 %v349
        %789 = vmatprep.subr.mxu0 0.0
        %790 = vmatpush1.msra.mxu0 %v348
        %791 = vmatprep.subr.mxu0 0.0
        %792 = vmatpush1.msra.mxu0 %v347
        %793 = vmatprep.subr.mxu0 0.0
        %794 = vmatpush1.msra.mxu0 %v346
        %795 = vmatprep.subr.mxu0 0.0
        %796 = vmatpush1.msra.mxu0 %v345
        %797 = vmatprep.subr.mxu0 0.0
        %798 = vmatpush2.msra.mxu0 0.0
        %799 = vmatprep.subr.mxu0 0.0
        %800 = vmatpush2.msra.mxu0 0.0
        %801 = vmatprep.subr.mxu0 0.0
        %802 = vmatpush2.msra.mxu0 0.0
        %803 = vmatprep.subr.mxu0 0.0
        %804 = vmatpush2.msra.mxu0 0.0
        %805 = vmatprep.subr.mxu0 0.0
        %806 = vmatpush2.msra.mxu0 0.0
        %807 = vmatprep.subr.mxu0 0.0
        %808 = vmatpush2.msra.mxu0 0.0
        %809 = vmatprep.subr.mxu0 0.0
        %810 = vmatpush2.msra.mxu0 0.0
        %811 = vmatprep.subr.mxu0 0.0
        %812 = vmatpush2.msra.mxu0 0.0
        %813 = vmatprep.subr.mxu0 0.0
        %814 = vmatpush2.msra.mxu0 0.0
        %815 = vmatprep.subr.mxu0 0.0
        %816 = vmatpush2.msra.mxu0 0.0
        %817 = vmatprep.subr.mxu0 0.0
        %818 = vmatpush2.msra.mxu0 0.0
        %819 = vmatprep.subr.mxu0 0.0
        %820 = vmatpush2.msra.mxu0 0.0
        %821 = vmatprep.subr.mxu0 0.0
        %822 = vmatpush2.msra.mxu0 0.0
        %823 = vmatprep.subr.mxu0 0.0
        %824 = vmatpush2.msra.mxu0 0.0
        %825 = vmatprep.subr.mxu0 0.0
        %826 = vmatpush2.msra.mxu0 0.0
        %827 = vmatprep.subr.mxu0 0.0
        %828 = vmatpush2.msra.mxu0 0.0
        %829 = vmatprep.mubr.f32.mxu0 0.0
        %830 = vmatmul.mubr.f32.gmra.mxu0 %v763
        %v831 = vpop.f32.mrf.mxu0
        %v832 = vadd.f32 1e-30, %v831
        %v833 = vpop.f32.mrf.mxu0
        %834 = vmatprep.mubr.f32.mxu0 0.0
        %835 = vmatmul.mubr.f32.gmra.mxu0 %v764
        %v836 = vpop.f32.mrf.mxu0
        %v837 = vadd.f32 1e-30, %v836
        %v838 = vpop.f32.mrf.mxu0
        %839 = vdwg.mxu0
        %v840 = vrcp.pop %v832
        %v841 = vrcp.pop %v837
        %v842 = vmul.f32 %v326, %v840
        %v843 = vmul.f32 %v327, %v841
        %v844 = vmul.f32 %v565, %v842
        %v845 = vmul.f32 %v566, %v843
        %v846 = vadd.f32 %v844, %v845
        %v847 = vrot.slane %v846, 4
        %v848 = vadd.f32 %v846, %v847
        %v849 = vrot.slane %v848, 2
        %v850 = vadd.f32 %v848, %v849
        %v851 = vrot.slane %v850, 1
        %v852 = vadd.f32 %v850, %v851
        %v853 = vadd.f32 %v852, 1e-30
        %v854 = vrcp.pop %v853
        %v855 = vmul.f32 %v328, %v854
        %v857 = vlaneseq
        %v858 = vshrl.u32 %v857, 7
        %v859 = vsub.s32 0, %v858
        %v860 = vrot.slane %v855, %v859
        %v862 = vmul.f32 %v565, %v860
        %v863 = vmul.f32 %v566, %v860
        %864 = vmatprep.subr.mxu0 0.0
        %865 = vmatpush1.msra.mxu0 %v360
        %866 = vmatprep.subr.mxu0 0.0
        %867 = vmatpush1.msra.mxu0 %v359
        %868 = vmatprep.subr.mxu0 0.0
        %869 = vmatpush1.msra.mxu0 %v358
        %870 = vmatprep.subr.mxu0 0.0
        %871 = vmatpush1.msra.mxu0 %v357
        %872 = vmatprep.subr.mxu0 0.0
        %873 = vmatpush1.msra.mxu0 %v356
        %874 = vmatprep.subr.mxu0 0.0
        %875 = vmatpush1.msra.mxu0 %v355
        %876 = vmatprep.subr.mxu0 0.0
        %877 = vmatpush1.msra.mxu0 %v354
        %878 = vmatprep.subr.mxu0 0.0
        %879 = vmatpush1.msra.mxu0 %v353
        %880 = vmatprep.subr.mxu0 0.0
        %881 = vmatpush1.msra.mxu0 %v352
        %882 = vmatprep.subr.mxu0 0.0
        %883 = vmatpush1.msra.mxu0 %v351
        %884 = vmatprep.subr.mxu0 0.0
        %885 = vmatpush1.msra.mxu0 %v350
        %886 = vmatprep.subr.mxu0 0.0
        %887 = vmatpush1.msra.mxu0 %v349
        %888 = vmatprep.subr.mxu0 0.0
        %889 = vmatpush1.msra.mxu0 %v348
        %890 = vmatprep.subr.mxu0 0.0
        %891 = vmatpush1.msra.mxu0 %v347
        %892 = vmatprep.subr.mxu0 0.0
        %893 = vmatpush1.msra.mxu0 %v346
        %894 = vmatprep.subr.mxu0 0.0
        %895 = vmatpush1.msra.mxu0 %v345
        %896 = vmatprep.subr.mxu0 0.0
        %897 = vmatpush2.msra.mxu0 0.0
        %898 = vmatprep.subr.mxu0 0.0
        %899 = vmatpush2.msra.mxu0 0.0
        %900 = vmatprep.subr.mxu0 0.0
        %901 = vmatpush2.msra.mxu0 0.0
        %902 = vmatprep.subr.mxu0 0.0
        %903 = vmatpush2.msra.mxu0 0.0
        %904 = vmatprep.subr.mxu0 0.0
        %905 = vmatpush2.msra.mxu0 0.0
        %906 = vmatprep.subr.mxu0 0.0
        %907 = vmatpush2.msra.mxu0 0.0
        %908 = vmatprep.subr.mxu0 0.0
        %909 = vmatpush2.msra.mxu0 0.0
        %910 = vmatprep.subr.mxu0 0.0
        %911 = vmatpush2.msra.mxu0 0.0
        %912 = vmatprep.subr.mxu0 0.0
        %913 = vmatpush2.msra.mxu0 0.0
        %914 = vmatprep.subr.mxu0 0.0
        %915 = vmatpush2.msra.mxu0 0.0
        %916 = vmatprep.subr.mxu0 0.0
        %917 = vmatpush2.msra.mxu0 0.0
        %918 = vmatprep.subr.mxu0 0.0
        %919 = vmatpush2.msra.mxu0 0.0
        %920 = vmatprep.subr.mxu0 0.0
        %921 = vmatpush2.msra.mxu0 0.0
        %922 = vmatprep.subr.mxu0 0.0
        %923 = vmatpush2.msra.mxu0 0.0
        %924 = vmatprep.subr.mxu0 0.0
        %925 = vmatpush2.msra.mxu0 0.0
        %926 = vmatprep.subr.mxu0 0.0
        %927 = vmatpush2.msra.mxu0 0.0
        %928 = vmatprep.mubr.f32.mxu0 0.0
        %929 = vmatmul.mubr.f32.gmra.mxu0 %v862
        %v930 = vpop.f32.mrf.mxu0
        %v931 = vadd.f32 1e-30, %v930
        %v932 = vpop.f32.mrf.mxu0
        %933 = vmatprep.mubr.f32.mxu0 0.0
        %934 = vmatmul.mubr.f32.gmra.mxu0 %v863
        %v935 = vpop.f32.mrf.mxu0
        %v936 = vadd.f32 1e-30, %v935
        %v937 = vpop.f32.mrf.mxu0
        %938 = vdwg.mxu0
        %v939 = vrcp.pop %v931
        %v940 = vrcp.pop %v936
        %v941 = vmul.f32 %v326, %v939
        %v942 = vmul.f32 %v327, %v940
        %v943 = vmul.f32 %v565, %v941
        %v944 = vmul.f32 %v566, %v942
        %v945 = vadd.f32 %v943, %v944
        %v946 = vrot.slane %v945, 4
        %v947 = vadd.f32 %v945, %v946
        %v948 = vrot.slane %v947, 2
        %v949 = vadd.f32 %v947, %v948
        %v950 = vrot.slane %v949, 1
        %v951 = vadd.f32 %v949, %v950
        %v952 = vadd.f32 %v951, 1e-30
        %v953 = vrcp.pop %v952
        %v954 = vmul.f32 %v328, %v953
        %v956 = vlaneseq
        %v957 = vshrl.u32 %v956, 7
        %v958 = vsub.s32 0, %v957
        %v959 = vrot.slane %v954, %v958
        %v961 = vmul.f32 %v565, %v959
        %v962 = vmul.f32 %v566, %v959
        %963 = vmatprep.subr.mxu0 0.0
        %964 = vmatpush1.msra.mxu0 %v360
        %965 = vmatprep.subr.mxu0 0.0
        %966 = vmatpush1.msra.mxu0 %v359
        %967 = vmatprep.subr.mxu0 0.0
        %968 = vmatpush1.msra.mxu0 %v358
        %969 = vmatprep.subr.mxu0 0.0
        %970 = vmatpush1.msra.mxu0 %v357
        %971 = vmatprep.subr.mxu0 0.0
        %972 = vmatpush1.msra.mxu0 %v356
        %973 = vmatprep.subr.mxu0 0.0
        %974 = vmatpush1.msra.mxu0 %v355
        %975 = vmatprep.subr.mxu0 0.0
        %976 = vmatpush1.msra.mxu0 %v354
        %977 = vmatprep.subr.mxu0 0.0
        %978 = vmatpush1.msra.mxu0 %v353
        %979 = vmatprep.subr.mxu0 0.0
        %980 = vmatpush1.msra.mxu0 %v352
        %981 = vmatprep.subr.mxu0 0.0
        %982 = vmatpush1.msra.mxu0 %v351
        %983 = vmatprep.subr.mxu0 0.0
        %984 = vmatpush1.msra.mxu0 %v350
        %985 = vmatprep.subr.mxu0 0.0
        %986 = vmatpush1.msra.mxu0 %v349
        %987 = vmatprep.subr.mxu0 0.0
        %988 = vmatpush1.msra.mxu0 %v348
        %989 = vmatprep.subr.mxu0 0.0
        %990 = vmatpush1.msra.mxu0 %v347
        %991 = vmatprep.subr.mxu0 0.0
        %992 = vmatpush1.msra.mxu0 %v346
        %993 = vmatprep.subr.mxu0 0.0
        %994 = vmatpush1.msra.mxu0 %v345
        %995 = vmatprep.subr.mxu0 0.0
        %996 = vmatpush2.msra.mxu0 0.0
        %997 = vmatprep.subr.mxu0 0.0
        %998 = vmatpush2.msra.mxu0 0.0
        %999 = vmatprep.subr.mxu0 0.0
        %1000 = vmatpush2.msra.mxu0 0.0
        %1001 = vmatprep.subr.mxu0 0.0
        %1002 = vmatpush2.msra.mxu0 0.0
        %1003 = vmatprep.subr.mxu0 0.0
        %1004 = vmatpush2.msra.mxu0 0.0
        %1005 = vmatprep.subr.mxu0 0.0
        %1006 = vmatpush2.msra.mxu0 0.0
        %1007 = vmatprep.subr.mxu0 0.0
        %1008 = vmatpush2.msra.mxu0 0.0
        %1009 = vmatprep.subr.mxu0 0.0
        %1010 = vmatpush2.msra.mxu0 0.0
        %1011 = vmatprep.subr.mxu0 0.0
        %1012 = vmatpush2.msra.mxu0 0.0
        %1013 = vmatprep.subr.mxu0 0.0
        %1014 = vmatpush2.msra.mxu0 0.0
        %1015 = vmatprep.subr.mxu0 0.0
        %1016 = vmatpush2.msra.mxu0 0.0
        %1017 = vmatprep.subr.mxu0 0.0
        %1018 = vmatpush2.msra.mxu0 0.0
        %1019 = vmatprep.subr.mxu0 0.0
        %1020 = vmatpush2.msra.mxu0 0.0
        %1021 = vmatprep.subr.mxu0 0.0
        %1022 = vmatpush2.msra.mxu0 0.0
        %1023 = vmatprep.subr.mxu0 0.0
        %1024 = vmatpush2.msra.mxu0 0.0
        %1025 = vmatprep.subr.mxu0 0.0
        %1026 = vmatpush2.msra.mxu0 0.0
        %1027 = vmatprep.mubr.f32.mxu0 0.0
        %1028 = vmatmul.mubr.f32.gmra.mxu0 %v961
        %v1029 = vpop.f32.mrf.mxu0
        %v1030 = vadd.f32 1e-30, %v1029
        %v1031 = vpop.f32.mrf.mxu0
        %1032 = vmatprep.mubr.f32.mxu0 0.0
        %1033 = vmatmul.mubr.f32.gmra.mxu0 %v962
        %v1034 = vpop.f32.mrf.mxu0
        %v1035 = vadd.f32 1e-30, %v1034
        %v1036 = vpop.f32.mrf.mxu0
        %1037 = vdwg.mxu0
        %v1038 = vrcp.pop %v1030
        %v1039 = vrcp.pop %v1035
        %v1040 = vmul.f32 %v326, %v1038
        %v1041 = vmul.f32 %v327, %v1039
        %v1042 = vmul.f32 %v565, %v1040
        %v1043 = vmul.f32 %v566, %v1041
        %v1044 = vadd.f32 %v1042, %v1043
        %v1045 = vrot.slane %v1044, 4
        %v1046 = vadd.f32 %v1044, %v1045
        %v1047 = vrot.slane %v1046, 2
        %v1048 = vadd.f32 %v1046, %v1047
        %v1049 = vrot.slane %v1048, 1
        %v1050 = vadd.f32 %v1048, %v1049
        %v1051 = vadd.f32 %v1050, 1e-30
        %v1052 = vrcp.pop %v1051
        %v1053 = vmul.f32 %v328, %v1052
        %v1055 = vlaneseq
        %v1056 = vshrl.u32 %v1055, 7
        %v1057 = vsub.s32 0, %v1056
        %v1058 = vrot.slane %v1053, %v1057
        %v1060 = vmul.f32 %v565, %v1058
        %v1061 = vmul.f32 %v566, %v1058
        %1062 = vmatprep.subr.mxu0 0.0
        %1063 = vmatpush1.msra.mxu0 %v360
        %1064 = vmatprep.subr.mxu0 0.0
        %1065 = vmatpush1.msra.mxu0 %v359
        %1066 = vmatprep.subr.mxu0 0.0
        %1067 = vmatpush1.msra.mxu0 %v358
        %1068 = vmatprep.subr.mxu0 0.0
        %1069 = vmatpush1.msra.mxu0 %v357
        %1070 = vmatprep.subr.mxu0 0.0
        %1071 = vmatpush1.msra.mxu0 %v356
        %1072 = vmatprep.subr.mxu0 0.0
        %1073 = vmatpush1.msra.mxu0 %v355
        %1074 = vmatprep.subr.mxu0 0.0
        %1075 = vmatpush1.msra.mxu0 %v354
        %1076 = vmatprep.subr.mxu0 0.0
        %1077 = vmatpush1.msra.mxu0 %v353
        %1078 = vmatprep.subr.mxu0 0.0
        %1079 = vmatpush1.msra.mxu0 %v352
        %1080 = vmatprep.subr.mxu0 0.0
        %1081 = vmatpush1.msra.mxu0 %v351
        %1082 = vmatprep.subr.mxu0 0.0
        %1083 = vmatpush1.msra.mxu0 %v350
        %1084 = vmatprep.subr.mxu0 0.0
        %1085 = vmatpush1.msra.mxu0 %v349
        %1086 = vmatprep.subr.mxu0 0.0
        %1087 = vmatpush1.msra.mxu0 %v348
        %1088 = vmatprep.subr.mxu0 0.0
        %1089 = vmatpush1.msra.mxu0 %v347
        %1090 = vmatprep.subr.mxu0 0.0
        %1091 = vmatpush1.msra.mxu0 %v346
        %1092 = vmatprep.subr.mxu0 0.0
        %1093 = vmatpush1.msra.mxu0 %v345
        %1094 = vmatprep.subr.mxu0 0.0
        %1095 = vmatpush2.msra.mxu0 0.0
        %1096 = vmatprep.subr.mxu0 0.0
        %1097 = vmatpush2.msra.mxu0 0.0
        %1098 = vmatprep.subr.mxu0 0.0
        %1099 = vmatpush2.msra.mxu0 0.0
        %1100 = vmatprep.subr.mxu0 0.0
        %1101 = vmatpush2.msra.mxu0 0.0
        %1102 = vmatprep.subr.mxu0 0.0
        %1103 = vmatpush2.msra.mxu0 0.0
        %1104 = vmatprep.subr.mxu0 0.0
        %1105 = vmatpush2.msra.mxu0 0.0
        %1106 = vmatprep.subr.mxu0 0.0
        %1107 = vmatpush2.msra.mxu0 0.0
        %1108 = vmatprep.subr.mxu0 0.0
        %1109 = vmatpush2.msra.mxu0 0.0
        %1110 = vmatprep.subr.mxu0 0.0
        %1111 = vmatpush2.msra.mxu0 0.0
        %1112 = vmatprep.subr.mxu0 0.0
        %1113 = vmatpush2.msra.mxu0 0.0
        %1114 = vmatprep.subr.mxu0 0.0
        %1115 = vmatpush2.msra.mxu0 0.0
        %1116 = vmatprep.subr.mxu0 0.0
        %1117 = vmatpush2.msra.mxu0 0.0
        %1118 = vmatprep.subr.mxu0 0.0
        %1119 = vmatpush2.msra.mxu0 0.0
        %1120 = vmatprep.subr.mxu0 0.0
        %1121 = vmatpush2.msra.mxu0 0.0
        %1122 = vmatprep.subr.mxu0 0.0
        %1123 = vmatpush2.msra.mxu0 0.0
        %1124 = vmatprep.subr.mxu0 0.0
        %1125 = vmatpush2.msra.mxu0 0.0
        %1126 = vmatprep.mubr.f32.mxu0 0.0
        %1127 = vmatmul.mubr.f32.gmra.mxu0 %v1060
        %v1128 = vpop.f32.mrf.mxu0
        %v1129 = vadd.f32 1e-30, %v1128
        %v1130 = vpop.f32.mrf.mxu0
        %1131 = vmatprep.mubr.f32.mxu0 0.0
        %1132 = vmatmul.mubr.f32.gmra.mxu0 %v1061
        %v1133 = vpop.f32.mrf.mxu0
        %v1134 = vadd.f32 1e-30, %v1133
        %v1135 = vpop.f32.mrf.mxu0
        %1136 = vdwg.mxu0
        %v1137 = vrcp.pop %v1129
        %v1138 = vrcp.pop %v1134
        %v1139 = vmul.f32 %v326, %v1137
        %v1140 = vmul.f32 %v327, %v1138
        %v1141 = vmul.f32 %v565, %v1139
        %v1142 = vmul.f32 %v566, %v1140
        %v1143 = vadd.f32 %v1141, %v1142
        %v1144 = vrot.slane %v1143, 4
        %v1145 = vadd.f32 %v1143, %v1144
        %v1146 = vrot.slane %v1145, 2
        %v1147 = vadd.f32 %v1145, %v1146
        %v1148 = vrot.slane %v1147, 1
        %v1149 = vadd.f32 %v1147, %v1148
        %v1150 = vadd.f32 %v1149, 1e-30
        %v1151 = vrcp.pop %v1150
        %v1152 = vmul.f32 %v328, %v1151
        %v1154 = vlaneseq
        %v1155 = vshrl.u32 %v1154, 7
        %v1156 = vsub.s32 0, %v1155
        %v1157 = vrot.slane %v1152, %v1156
        %v1159 = vmul.f32 %v565, %v1157
        %v1160 = vmul.f32 %v566, %v1157
        %1161 = vmatprep.subr.mxu0 0.0
        %1162 = vmatpush1.msra.mxu0 %v360
        %1163 = vmatprep.subr.mxu0 0.0
        %1164 = vmatpush1.msra.mxu0 %v359
        %1165 = vmatprep.subr.mxu0 0.0
        %1166 = vmatpush1.msra.mxu0 %v358
        %1167 = vmatprep.subr.mxu0 0.0
        %1168 = vmatpush1.msra.mxu0 %v357
        %1169 = vmatprep.subr.mxu0 0.0
        %1170 = vmatpush1.msra.mxu0 %v356
        %1171 = vmatprep.subr.mxu0 0.0
        %1172 = vmatpush1.msra.mxu0 %v355
        %1173 = vmatprep.subr.mxu0 0.0
        %1174 = vmatpush1.msra.mxu0 %v354
        %1175 = vmatprep.subr.mxu0 0.0
        %1176 = vmatpush1.msra.mxu0 %v353
        %1177 = vmatprep.subr.mxu0 0.0
        %1178 = vmatpush1.msra.mxu0 %v352
        %1179 = vmatprep.subr.mxu0 0.0
        %1180 = vmatpush1.msra.mxu0 %v351
        %1181 = vmatprep.subr.mxu0 0.0
        %1182 = vmatpush1.msra.mxu0 %v350
        %1183 = vmatprep.subr.mxu0 0.0
        %1184 = vmatpush1.msra.mxu0 %v349
        %1185 = vmatprep.subr.mxu0 0.0
        %1186 = vmatpush1.msra.mxu0 %v348
        %1187 = vmatprep.subr.mxu0 0.0
        %1188 = vmatpush1.msra.mxu0 %v347
        %1189 = vmatprep.subr.mxu0 0.0
        %1190 = vmatpush1.msra.mxu0 %v346
        %1191 = vmatprep.subr.mxu0 0.0
        %1192 = vmatpush1.msra.mxu0 %v345
        %1193 = vmatprep.subr.mxu0 0.0
        %1194 = vmatpush2.msra.mxu0 0.0
        %1195 = vmatprep.subr.mxu0 0.0
        %1196 = vmatpush2.msra.mxu0 0.0
        %1197 = vmatprep.subr.mxu0 0.0
        %1198 = vmatpush2.msra.mxu0 0.0
        %1199 = vmatprep.subr.mxu0 0.0
        %1200 = vmatpush2.msra.mxu0 0.0
        %1201 = vmatprep.subr.mxu0 0.0
        %1202 = vmatpush2.msra.mxu0 0.0
        %1203 = vmatprep.subr.mxu0 0.0
        %1204 = vmatpush2.msra.mxu0 0.0
        %1205 = vmatprep.subr.mxu0 0.0
        %1206 = vmatpush2.msra.mxu0 0.0
        %1207 = vmatprep.subr.mxu0 0.0
        %1208 = vmatpush2.msra.mxu0 0.0
        %1209 = vmatprep.subr.mxu0 0.0
        %1210 = vmatpush2.msra.mxu0 0.0
        %1211 = vmatprep.subr.mxu0 0.0
        %1212 = vmatpush2.msra.mxu0 0.0
        %1213 = vmatprep.subr.mxu0 0.0
        %1214 = vmatpush2.msra.mxu0 0.0
        %1215 = vmatprep.subr.mxu0 0.0
        %1216 = vmatpush2.msra.mxu0 0.0
        %1217 = vmatprep.subr.mxu0 0.0
        %1218 = vmatpush2.msra.mxu0 0.0
        %1219 = vmatprep.subr.mxu0 0.0
        %1220 = vmatpush2.msra.mxu0 0.0
        %1221 = vmatprep.subr.mxu0 0.0
        %1222 = vmatpush2.msra.mxu0 0.0
        %1223 = vmatprep.subr.mxu0 0.0
        %1224 = vmatpush2.msra.mxu0 0.0
        %1225 = vmatprep.mubr.f32.mxu0 0.0
        %1226 = vmatmul.mubr.f32.gmra.mxu0 %v1159
        %v1227 = vpop.f32.mrf.mxu0
        %v1228 = vadd.f32 1e-30, %v1227
        %v1229 = vpop.f32.mrf.mxu0
        %1230 = vmatprep.mubr.f32.mxu0 0.0
        %1231 = vmatmul.mubr.f32.gmra.mxu0 %v1160
        %v1232 = vpop.f32.mrf.mxu0
        %v1233 = vadd.f32 1e-30, %v1232
        %v1234 = vpop.f32.mrf.mxu0
        %1235 = vdwg.mxu0
        %v1236 = vrcp.pop %v1228
        %v1237 = vrcp.pop %v1233
        %v1238 = vmul.f32 %v326, %v1236
        %v1239 = vmul.f32 %v327, %v1237
        %v1240 = vmul.f32 %v565, %v1238
        %v1241 = vmul.f32 %v566, %v1239
        %v1242 = vadd.f32 %v1240, %v1241
        %v1243 = vrot.slane %v1242, 4
        %v1244 = vadd.f32 %v1242, %v1243
        %v1245 = vrot.slane %v1244, 2
        %v1246 = vadd.f32 %v1244, %v1245
        %v1247 = vrot.slane %v1246, 1
        %v1248 = vadd.f32 %v1246, %v1247
        %v1249 = vadd.f32 %v1248, 1e-30
        %v1250 = vrcp.pop %v1249
        %v1251 = vmul.f32 %v328, %v1250
        %v1253 = vlaneseq
        %v1254 = vshrl.u32 %v1253, 7
        %v1255 = vsub.s32 0, %v1254
        %v1256 = vrot.slane %v1251, %v1255
        %v1258 = vmul.f32 %v565, %v1256
        %v1259 = vmul.f32 %v566, %v1256
        %1260 = vmatprep.subr.mxu0 0.0
        %1261 = vmatpush1.msra.mxu0 %v360
        %1262 = vmatprep.subr.mxu0 0.0
        %1263 = vmatpush1.msra.mxu0 %v359
        %1264 = vmatprep.subr.mxu0 0.0
        %1265 = vmatpush1.msra.mxu0 %v358
        %1266 = vmatprep.subr.mxu0 0.0
        %1267 = vmatpush1.msra.mxu0 %v357
        %1268 = vmatprep.subr.mxu0 0.0
        %1269 = vmatpush1.msra.mxu0 %v356
        %1270 = vmatprep.subr.mxu0 0.0
        %1271 = vmatpush1.msra.mxu0 %v355
        %1272 = vmatprep.subr.mxu0 0.0
        %1273 = vmatpush1.msra.mxu0 %v354
        %1274 = vmatprep.subr.mxu0 0.0
        %1275 = vmatpush1.msra.mxu0 %v353
        %1276 = vmatprep.subr.mxu0 0.0
        %1277 = vmatpush1.msra.mxu0 %v352
        %1278 = vmatprep.subr.mxu0 0.0
        %1279 = vmatpush1.msra.mxu0 %v351
        %1280 = vmatprep.subr.mxu0 0.0
        %1281 = vmatpush1.msra.mxu0 %v350
        %1282 = vmatprep.subr.mxu0 0.0
        %1283 = vmatpush1.msra.mxu0 %v349
        %1284 = vmatprep.subr.mxu0 0.0
        %1285 = vmatpush1.msra.mxu0 %v348
        %1286 = vmatprep.subr.mxu0 0.0
        %1287 = vmatpush1.msra.mxu0 %v347
        %1288 = vmatprep.subr.mxu0 0.0
        %1289 = vmatpush1.msra.mxu0 %v346
        %1290 = vmatprep.subr.mxu0 0.0
        %1291 = vmatpush1.msra.mxu0 %v345
        %1292 = vmatprep.subr.mxu0 0.0
        %1293 = vmatpush2.msra.mxu0 0.0
        %1294 = vmatprep.subr.mxu0 0.0
        %1295 = vmatpush2.msra.mxu0 0.0
        %1296 = vmatprep.subr.mxu0 0.0
        %1297 = vmatpush2.msra.mxu0 0.0
        %1298 = vmatprep.subr.mxu0 0.0
        %1299 = vmatpush2.msra.mxu0 0.0
        %1300 = vmatprep.subr.mxu0 0.0
        %1301 = vmatpush2.msra.mxu0 0.0
        %1302 = vmatprep.subr.mxu0 0.0
        %1303 = vmatpush2.msra.mxu0 0.0
        %1304 = vmatprep.subr.mxu0 0.0
        %1305 = vmatpush2.msra.mxu0 0.0
        %1306 = vmatprep.subr.mxu0 0.0
        %1307 = vmatpush2.msra.mxu0 0.0
        %1308 = vmatprep.subr.mxu0 0.0
        %1309 = vmatpush2.msra.mxu0 0.0
        %1310 = vmatprep.subr.mxu0 0.0
        %1311 = vmatpush2.msra.mxu0 0.0
        %1312 = vmatprep.subr.mxu0 0.0
        %1313 = vmatpush2.msra.mxu0 0.0
        %1314 = vmatprep.subr.mxu0 0.0
        %1315 = vmatpush2.msra.mxu0 0.0
        %1316 = vmatprep.subr.mxu0 0.0
        %1317 = vmatpush2.msra.mxu0 0.0
        %1318 = vmatprep.subr.mxu0 0.0
        %1319 = vmatpush2.msra.mxu0 0.0
        %1320 = vmatprep.subr.mxu0 0.0
        %1321 = vmatpush2.msra.mxu0 0.0
        %1322 = vmatprep.subr.mxu0 0.0
        %1323 = vmatpush2.msra.mxu0 0.0
        %1324 = vmatprep.mubr.f32.mxu0 0.0
        %1325 = vmatmul.mubr.f32.gmra.mxu0 %v1258
        %v1326 = vpop.f32.mrf.mxu0
        %v1327 = vadd.f32 1e-30, %v1326
        %v1328 = vpop.f32.mrf.mxu0
        %1329 = vmatprep.mubr.f32.mxu0 0.0
        %1330 = vmatmul.mubr.f32.gmra.mxu0 %v1259
        %v1331 = vpop.f32.mrf.mxu0
        %v1332 = vadd.f32 1e-30, %v1331
        %v1333 = vpop.f32.mrf.mxu0
        %1334 = vdwg.mxu0
        %v1335 = vrcp.pop %v1327
        %v1336 = vrcp.pop %v1332
        %v1337 = vmul.f32 %v326, %v1335
        %v1338 = vmul.f32 %v327, %v1336
        %v1339 = vmul.f32 %v565, %v1337
        %v1340 = vmul.f32 %v566, %v1338
        %v1341 = vadd.f32 %v1339, %v1340
        %v1342 = vrot.slane %v1341, 4
        %v1343 = vadd.f32 %v1341, %v1342
        %v1344 = vrot.slane %v1343, 2
        %v1345 = vadd.f32 %v1343, %v1344
        %v1346 = vrot.slane %v1345, 1
        %v1347 = vadd.f32 %v1345, %v1346
        %v1348 = vadd.f32 %v1347, 1e-30
        %v1349 = vrcp.pop %v1348
        %v1350 = vmul.f32 %v328, %v1349
        %v1352 = vlaneseq
        %v1353 = vshrl.u32 %v1352, 7
        %v1354 = vsub.s32 0, %v1353
        %v1355 = vrot.slane %v1350, %v1354
        %v1357 = vmul.f32 %v565, %v1355
        %v1358 = vmul.f32 %v566, %v1355
        %1359 = vmatprep.subr.mxu0 0.0
        %1360 = vmatpush1.msra.mxu0 %v360
        %1361 = vmatprep.subr.mxu0 0.0
        %1362 = vmatpush1.msra.mxu0 %v359
        %1363 = vmatprep.subr.mxu0 0.0
        %1364 = vmatpush1.msra.mxu0 %v358
        %1365 = vmatprep.subr.mxu0 0.0
        %1366 = vmatpush1.msra.mxu0 %v357
        %1367 = vmatprep.subr.mxu0 0.0
        %1368 = vmatpush1.msra.mxu0 %v356
        %1369 = vmatprep.subr.mxu0 0.0
        %1370 = vmatpush1.msra.mxu0 %v355
        %1371 = vmatprep.subr.mxu0 0.0
        %1372 = vmatpush1.msra.mxu0 %v354
        %1373 = vmatprep.subr.mxu0 0.0
        %1374 = vmatpush1.msra.mxu0 %v353
        %1375 = vmatprep.subr.mxu0 0.0
        %1376 = vmatpush1.msra.mxu0 %v352
        %1377 = vmatprep.subr.mxu0 0.0
        %1378 = vmatpush1.msra.mxu0 %v351
        %1379 = vmatprep.subr.mxu0 0.0
        %1380 = vmatpush1.msra.mxu0 %v350
        %1381 = vmatprep.subr.mxu0 0.0
        %1382 = vmatpush1.msra.mxu0 %v349
        %1383 = vmatprep.subr.mxu0 0.0
        %1384 = vmatpush1.msra.mxu0 %v348
        %1385 = vmatprep.subr.mxu0 0.0
        %1386 = vmatpush1.msra.mxu0 %v347
        %1387 = vmatprep.subr.mxu0 0.0
        %1388 = vmatpush1.msra.mxu0 %v346
        %1389 = vmatprep.subr.mxu0 0.0
        %1390 = vmatpush1.msra.mxu0 %v345
        %1391 = vmatprep.subr.mxu0 0.0
        %1392 = vmatpush2.msra.mxu0 0.0
        %1393 = vmatprep.subr.mxu0 0.0
        %1394 = vmatpush2.msra.mxu0 0.0
        %1395 = vmatprep.subr.mxu0 0.0
        %1396 = vmatpush2.msra.mxu0 0.0
        %1397 = vmatprep.subr.mxu0 0.0
        %1398 = vmatpush2.msra.mxu0 0.0
        %1399 = vmatprep.subr.mxu0 0.0
        %1400 = vmatpush2.msra.mxu0 0.0
        %1401 = vmatprep.subr.mxu0 0.0
        %1402 = vmatpush2.msra.mxu0 0.0
        %1403 = vmatprep.subr.mxu0 0.0
        %1404 = vmatpush2.msra.mxu0 0.0
        %1405 = vmatprep.subr.mxu0 0.0
        %1406 = vmatpush2.msra.mxu0 0.0
        %1407 = vmatprep.subr.mxu0 0.0
        %1408 = vmatpush2.msra.mxu0 0.0
        %1409 = vmatprep.subr.mxu0 0.0
        %1410 = vmatpush2.msra.mxu0 0.0
        %1411 = vmatprep.subr.mxu0 0.0
        %1412 = vmatpush2.msra.mxu0 0.0
        %1413 = vmatprep.subr.mxu0 0.0
        %1414 = vmatpush2.msra.mxu0 0.0
        %1415 = vmatprep.subr.mxu0 0.0
        %1416 = vmatpush2.msra.mxu0 0.0
        %1417 = vmatprep.subr.mxu0 0.0
        %1418 = vmatpush2.msra.mxu0 0.0
        %1419 = vmatprep.subr.mxu0 0.0
        %1420 = vmatpush2.msra.mxu0 0.0
        %1421 = vmatprep.subr.mxu0 0.0
        %1422 = vmatpush2.msra.mxu0 0.0
        %1423 = vmatprep.mubr.f32.mxu0 0.0
        %1424 = vmatmul.mubr.f32.gmra.mxu0 %v1357
        %v1425 = vpop.f32.mrf.mxu0
        %v1426 = vadd.f32 1e-30, %v1425
        %v1427 = vpop.f32.mrf.mxu0
        %1428 = vmatprep.mubr.f32.mxu0 0.0
        %1429 = vmatmul.mubr.f32.gmra.mxu0 %v1358
        %v1430 = vpop.f32.mrf.mxu0
        %v1431 = vadd.f32 1e-30, %v1430
        %v1432 = vpop.f32.mrf.mxu0
        %1433 = vdwg.mxu0
        %v1434 = vrcp.pop %v1426
        %v1435 = vrcp.pop %v1431
        %v1436 = vmul.f32 %v326, %v1434
        %v1437 = vmul.f32 %v327, %v1435
        %v1438 = vmul.f32 %v565, %v1436
        %v1439 = vmul.f32 %v566, %v1437
        %v1440 = vadd.f32 %v1438, %v1439
        %v1441 = vrot.slane %v1440, 4
        %v1442 = vadd.f32 %v1440, %v1441
        %v1443 = vrot.slane %v1442, 2
        %v1444 = vadd.f32 %v1442, %v1443
        %v1445 = vrot.slane %v1444, 1
        %v1446 = vadd.f32 %v1444, %v1445
        %v1447 = vadd.f32 %v1446, 1e-30
        %v1448 = vrcp.pop %v1447
        %v1449 = vmul.f32 %v328, %v1448
        %v1451 = vlaneseq
        %v1452 = vshrl.u32 %v1451, 7
        %v1453 = vsub.s32 0, %v1452
        %v1454 = vrot.slane %v1449, %v1453
        %v1456 = vmul.f32 %v565, %v1454
        %v1457 = vmul.f32 %v566, %v1454
        %1458 = vmatprep.subr.mxu0 0.0
        %1459 = vmatpush1.msra.mxu0 %v360
        %1460 = vmatprep.subr.mxu0 0.0
        %1461 = vmatpush1.msra.mxu0 %v359
        %1462 = vmatprep.subr.mxu0 0.0
        %1463 = vmatpush1.msra.mxu0 %v358
        %1464 = vmatprep.subr.mxu0 0.0
        %1465 = vmatpush1.msra.mxu0 %v357
        %1466 = vmatprep.subr.mxu0 0.0
        %1467 = vmatpush1.msra.mxu0 %v356
        %1468 = vmatprep.subr.mxu0 0.0
        %1469 = vmatpush1.msra.mxu0 %v355
        %1470 = vmatprep.subr.mxu0 0.0
        %1471 = vmatpush1.msra.mxu0 %v354
        %1472 = vmatprep.subr.mxu0 0.0
        %1473 = vmatpush1.msra.mxu0 %v353
        %1474 = vmatprep.subr.mxu0 0.0
        %1475 = vmatpush1.msra.mxu0 %v352
        %1476 = vmatprep.subr.mxu0 0.0
        %1477 = vmatpush1.msra.mxu0 %v351
        %1478 = vmatprep.subr.mxu0 0.0
        %1479 = vmatpush1.msra.mxu0 %v350
        %1480 = vmatprep.subr.mxu0 0.0
        %1481 = vmatpush1.msra.mxu0 %v349
        %1482 = vmatprep.subr.mxu0 0.0
        %1483 = vmatpush1.msra.mxu0 %v348
        %1484 = vmatprep.subr.mxu0 0.0
        %1485 = vmatpush1.msra.mxu0 %v347
        %1486 = vmatprep.subr.mxu0 0.0
        %1487 = vmatpush1.msra.mxu0 %v346
        %1488 = vmatprep.subr.mxu0 0.0
        %1489 = vmatpush1.msra.mxu0 %v345
        %1490 = vmatprep.subr.mxu0 0.0
        %1491 = vmatpush2.msra.mxu0 0.0
        %1492 = vmatprep.subr.mxu0 0.0
        %1493 = vmatpush2.msra.mxu0 0.0
        %1494 = vmatprep.subr.mxu0 0.0
        %1495 = vmatpush2.msra.mxu0 0.0
        %1496 = vmatprep.subr.mxu0 0.0
        %1497 = vmatpush2.msra.mxu0 0.0
        %1498 = vmatprep.subr.mxu0 0.0
        %1499 = vmatpush2.msra.mxu0 0.0
        %1500 = vmatprep.subr.mxu0 0.0
        %1501 = vmatpush2.msra.mxu0 0.0
        %1502 = vmatprep.subr.mxu0 0.0
        %1503 = vmatpush2.msra.mxu0 0.0
        %1504 = vmatprep.subr.mxu0 0.0
        %1505 = vmatpush2.msra.mxu0 0.0
        %1506 = vmatprep.subr.mxu0 0.0
        %1507 = vmatpush2.msra.mxu0 0.0
        %1508 = vmatprep.subr.mxu0 0.0
        %1509 = vmatpush2.msra.mxu0 0.0
        %1510 = vmatprep.subr.mxu0 0.0
        %1511 = vmatpush2.msra.mxu0 0.0
        %1512 = vmatprep.subr.mxu0 0.0
        %1513 = vmatpush2.msra.mxu0 0.0
        %1514 = vmatprep.subr.mxu0 0.0
        %1515 = vmatpush2.msra.mxu0 0.0
        %1516 = vmatprep.subr.mxu0 0.0
        %1517 = vmatpush2.msra.mxu0 0.0
        %1518 = vmatprep.subr.mxu0 0.0
        %1519 = vmatpush2.msra.mxu0 0.0
        %1520 = vmatprep.subr.mxu0 0.0
        %1521 = vmatpush2.msra.mxu0 0.0
        %1522 = vmatprep.mubr.f32.mxu0 0.0
        %1523 = vmatmul.mubr.f32.gmra.mxu0 %v1456
        %v1524 = vpop.f32.mrf.mxu0
        %v1525 = vadd.f32 1e-30, %v1524
        %v1526 = vpop.f32.mrf.mxu0
        %1527 = vmatprep.mubr.f32.mxu0 0.0
        %1528 = vmatmul.mubr.f32.gmra.mxu0 %v1457
        %v1529 = vpop.f32.mrf.mxu0
        %v1530 = vadd.f32 1e-30, %v1529
        %v1531 = vpop.f32.mrf.mxu0
        %1532 = vdwg.mxu0
        %v1533 = vrcp.pop %v1525
        %v1534 = vrcp.pop %v1530
        %v1535 = vmul.f32 %v326, %v1533
        %v1536 = vmul.f32 %v327, %v1534
        %v1537 = vmul.f32 %v565, %v1535
        %v1538 = vmul.f32 %v566, %v1536
        %v1539 = vadd.f32 %v1537, %v1538
        %v1540 = vrot.slane %v1539, 4
        %v1541 = vadd.f32 %v1539, %v1540
        %v1542 = vrot.slane %v1541, 2
        %v1543 = vadd.f32 %v1541, %v1542
        %v1544 = vrot.slane %v1543, 1
        %v1545 = vadd.f32 %v1543, %v1544
        %v1546 = vadd.f32 %v1545, 1e-30
        %v1547 = vrcp.pop %v1546
        %v1548 = vmul.f32 %v328, %v1547
        %v1550 = vlaneseq
        %v1551 = vshrl.u32 %v1550, 7
        %v1552 = vsub.s32 0, %v1551
        %v1553 = vrot.slane %v1548, %v1552
        %v1555 = vmul.f32 %v565, %v1553
        %v1556 = vmul.f32 %v566, %v1553
        %1557 = vmatprep.subr.mxu0 0.0
        %1558 = vmatpush1.msra.mxu0 %v360
        %1559 = vmatprep.subr.mxu0 0.0
        %1560 = vmatpush1.msra.mxu0 %v359
        %1561 = vmatprep.subr.mxu0 0.0
        %1562 = vmatpush1.msra.mxu0 %v358
        %1563 = vmatprep.subr.mxu0 0.0
        %1564 = vmatpush1.msra.mxu0 %v357
        %1565 = vmatprep.subr.mxu0 0.0
        %1566 = vmatpush1.msra.mxu0 %v356
        %1567 = vmatprep.subr.mxu0 0.0
        %1568 = vmatpush1.msra.mxu0 %v355
        %1569 = vmatprep.subr.mxu0 0.0
        %1570 = vmatpush1.msra.mxu0 %v354
        %1571 = vmatprep.subr.mxu0 0.0
        %1572 = vmatpush1.msra.mxu0 %v353
        %1573 = vmatprep.subr.mxu0 0.0
        %1574 = vmatpush1.msra.mxu0 %v352
        %1575 = vmatprep.subr.mxu0 0.0
        %1576 = vmatpush1.msra.mxu0 %v351
        %1577 = vmatprep.subr.mxu0 0.0
        %1578 = vmatpush1.msra.mxu0 %v350
        %1579 = vmatprep.subr.mxu0 0.0
        %1580 = vmatpush1.msra.mxu0 %v349
        %1581 = vmatprep.subr.mxu0 0.0
        %1582 = vmatpush1.msra.mxu0 %v348
        %1583 = vmatprep.subr.mxu0 0.0
        %1584 = vmatpush1.msra.mxu0 %v347
        %1585 = vmatprep.subr.mxu0 0.0
        %1586 = vmatpush1.msra.mxu0 %v346
        %1587 = vmatprep.subr.mxu0 0.0
        %1588 = vmatpush1.msra.mxu0 %v345
        %1589 = vmatprep.subr.mxu0 0.0
        %1590 = vmatpush2.msra.mxu0 0.0
        %1591 = vmatprep.subr.mxu0 0.0
        %1592 = vmatpush2.msra.mxu0 0.0
        %1593 = vmatprep.subr.mxu0 0.0
        %1594 = vmatpush2.msra.mxu0 0.0
        %1595 = vmatprep.subr.mxu0 0.0
        %1596 = vmatpush2.msra.mxu0 0.0
        %1597 = vmatprep.subr.mxu0 0.0
        %1598 = vmatpush2.msra.mxu0 0.0
        %1599 = vmatprep.subr.mxu0 0.0
        %1600 = vmatpush2.msra.mxu0 0.0
        %1601 = vmatprep.subr.mxu0 0.0
        %1602 = vmatpush2.msra.mxu0 0.0
        %1603 = vmatprep.subr.mxu0 0.0
        %1604 = vmatpush2.msra.mxu0 0.0
        %1605 = vmatprep.subr.mxu0 0.0
        %1606 = vmatpush2.msra.mxu0 0.0
        %1607 = vmatprep.subr.mxu0 0.0
        %1608 = vmatpush2.msra.mxu0 0.0
        %1609 = vmatprep.subr.mxu0 0.0
        %1610 = vmatpush2.msra.mxu0 0.0
        %1611 = vmatprep.subr.mxu0 0.0
        %1612 = vmatpush2.msra.mxu0 0.0
        %1613 = vmatprep.subr.mxu0 0.0
        %1614 = vmatpush2.msra.mxu0 0.0
        %1615 = vmatprep.subr.mxu0 0.0
        %1616 = vmatpush2.msra.mxu0 0.0
        %1617 = vmatprep.subr.mxu0 0.0
        %1618 = vmatpush2.msra.mxu0 0.0
        %1619 = vmatprep.subr.mxu0 0.0
        %1620 = vmatpush2.msra.mxu0 0.0
        %1621 = vmatprep.mubr.f32.mxu0 0.0
        %1622 = vmatmul.mubr.f32.gmra.mxu0 %v1555
        %v1623 = vpop.f32.mrf.mxu0
        %v1624 = vadd.f32 1e-30, %v1623
        %v1625 = vpop.f32.mrf.mxu0
        %1626 = vmatprep.mubr.f32.mxu0 0.0
        %1627 = vmatmul.mubr.f32.gmra.mxu0 %v1556
        %v1628 = vpop.f32.mrf.mxu0
        %v1629 = vadd.f32 1e-30, %v1628
        %v1630 = vpop.f32.mrf.mxu0
        %1631 = vdwg.mxu0
        %v1632 = vrcp.pop %v1624
        %v1633 = vrcp.pop %v1629
        %v1634 = vmul.f32 %v326, %v1632
        %v1635 = vmul.f32 %v327, %v1633
        %v1636 = vmul.f32 %v565, %v1634
        %v1637 = vmul.f32 %v566, %v1635
        %v1638 = vadd.f32 %v1636, %v1637
        %v1639 = vrot.slane %v1638, 4
        %v1640 = vadd.f32 %v1638, %v1639
        %v1641 = vrot.slane %v1640, 2
        %v1642 = vadd.f32 %v1640, %v1641
        %v1643 = vrot.slane %v1642, 1
        %v1644 = vadd.f32 %v1642, %v1643
        %v1645 = vadd.f32 %v1644, 1e-30
        %v1646 = vrcp.pop %v1645
        %v1647 = vmul.f32 %v328, %v1646
        %v1649 = vlaneseq
        %v1650 = vshrl.u32 %v1649, 7
        %v1651 = vsub.s32 0, %v1650
        %v1652 = vrot.slane %v1647, %v1651
        %v1654 = vmul.f32 %v565, %v1652
        %v1655 = vmul.f32 %v566, %v1652
        %1656 = vmatprep.subr.mxu0 0.0
        %1657 = vmatpush1.msra.mxu0 %v360
        %1658 = vmatprep.subr.mxu0 0.0
        %1659 = vmatpush1.msra.mxu0 %v359
        %1660 = vmatprep.subr.mxu0 0.0
        %1661 = vmatpush1.msra.mxu0 %v358
        %1662 = vmatprep.subr.mxu0 0.0
        %1663 = vmatpush1.msra.mxu0 %v357
        %1664 = vmatprep.subr.mxu0 0.0
        %1665 = vmatpush1.msra.mxu0 %v356
        %1666 = vmatprep.subr.mxu0 0.0
        %1667 = vmatpush1.msra.mxu0 %v355
        %1668 = vmatprep.subr.mxu0 0.0
        %1669 = vmatpush1.msra.mxu0 %v354
        %1670 = vmatprep.subr.mxu0 0.0
        %1671 = vmatpush1.msra.mxu0 %v353
        %1672 = vmatprep.subr.mxu0 0.0
        %1673 = vmatpush1.msra.mxu0 %v352
        %1674 = vmatprep.subr.mxu0 0.0
        %1675 = vmatpush1.msra.mxu0 %v351
        %1676 = vmatprep.subr.mxu0 0.0
        %1677 = vmatpush1.msra.mxu0 %v350
        %1678 = vmatprep.subr.mxu0 0.0
        %1679 = vmatpush1.msra.mxu0 %v349
        %1680 = vmatprep.subr.mxu0 0.0
        %1681 = vmatpush1.msra.mxu0 %v348
        %1682 = vmatprep.subr.mxu0 0.0
        %1683 = vmatpush1.msra.mxu0 %v347
        %1684 = vmatprep.subr.mxu0 0.0
        %1685 = vmatpush1.msra.mxu0 %v346
        %1686 = vmatprep.subr.mxu0 0.0
        %1687 = vmatpush1.msra.mxu0 %v345
        %1688 = vmatprep.subr.mxu0 0.0
        %1689 = vmatpush2.msra.mxu0 0.0
        %1690 = vmatprep.subr.mxu0 0.0
        %1691 = vmatpush2.msra.mxu0 0.0
        %1692 = vmatprep.subr.mxu0 0.0
        %1693 = vmatpush2.msra.mxu0 0.0
        %1694 = vmatprep.subr.mxu0 0.0
        %1695 = vmatpush2.msra.mxu0 0.0
        %1696 = vmatprep.subr.mxu0 0.0
        %1697 = vmatpush2.msra.mxu0 0.0
        %1698 = vmatprep.subr.mxu0 0.0
        %1699 = vmatpush2.msra.mxu0 0.0
        %1700 = vmatprep.subr.mxu0 0.0
        %1701 = vmatpush2.msra.mxu0 0.0
        %1702 = vmatprep.subr.mxu0 0.0
        %1703 = vmatpush2.msra.mxu0 0.0
        %1704 = vmatprep.subr.mxu0 0.0
        %1705 = vmatpush2.msra.mxu0 0.0
        %1706 = vmatprep.subr.mxu0 0.0
        %1707 = vmatpush2.msra.mxu0 0.0
        %1708 = vmatprep.subr.mxu0 0.0
        %1709 = vmatpush2.msra.mxu0 0.0
        %1710 = vmatprep.subr.mxu0 0.0
        %1711 = vmatpush2.msra.mxu0 0.0
        %1712 = vmatprep.subr.mxu0 0.0
        %1713 = vmatpush2.msra.mxu0 0.0
        %1714 = vmatprep.subr.mxu0 0.0
        %1715 = vmatpush2.msra.mxu0 0.0
        %1716 = vmatprep.subr.mxu0 0.0
        %1717 = vmatpush2.msra.mxu0 0.0
        %1718 = vmatprep.subr.mxu0 0.0
        %1719 = vmatpush2.msra.mxu0 0.0
        %1720 = vmatprep.mubr.f32.mxu0 0.0
        %1721 = vmatmul.mubr.f32.gmra.mxu0 %v1654
        %v1722 = vpop.f32.mrf.mxu0
        %v1723 = vadd.f32 1e-30, %v1722
        %v1724 = vpop.f32.mrf.mxu0
        %1725 = vmatprep.mubr.f32.mxu0 0.0
        %1726 = vmatmul.mubr.f32.gmra.mxu0 %v1655
        %v1727 = vpop.f32.mrf.mxu0
        %v1728 = vadd.f32 1e-30, %v1727
        %v1729 = vpop.f32.mrf.mxu0
        %1730 = vdwg.mxu0
        %v1731 = vrcp.pop %v1723
        %v1732 = vrcp.pop %v1728
        %v1733 = vmul.f32 %v326, %v1731
        %v1734 = vmul.f32 %v327, %v1732
        %v1735 = vmul.f32 %v565, %v1733
        %v1736 = vmul.f32 %v566, %v1734
        %v1737 = vadd.f32 %v1735, %v1736
        %v1738 = vrot.slane %v1737, 4
        %v1739 = vadd.f32 %v1737, %v1738
        %v1740 = vrot.slane %v1739, 2
        %v1741 = vadd.f32 %v1739, %v1740
        %v1742 = vrot.slane %v1741, 1
        %v1743 = vadd.f32 %v1741, %v1742
        %v1744 = vadd.f32 %v1743, 1e-30
        %v1745 = vrcp.pop %v1744
        %v1746 = vmul.f32 %v328, %v1745
        %v1748 = vlaneseq
        %v1749 = vshrl.u32 %v1748, 7
        %v1750 = vsub.s32 0, %v1749
        %v1751 = vrot.slane %v1746, %v1750
        %v1753 = vmul.f32 %v565, %v1751
        %v1754 = vmul.f32 %v566, %v1751
        %1755 = vmatprep.subr.mxu0 0.0
        %1756 = vmatpush1.msra.mxu0 %v360
        %1757 = vmatprep.subr.mxu0 0.0
        %1758 = vmatpush1.msra.mxu0 %v359
        %1759 = vmatprep.subr.mxu0 0.0
        %1760 = vmatpush1.msra.mxu0 %v358
        %1761 = vmatprep.subr.mxu0 0.0
        %1762 = vmatpush1.msra.mxu0 %v357
        %1763 = vmatprep.subr.mxu0 0.0
        %1764 = vmatpush1.msra.mxu0 %v356
        %1765 = vmatprep.subr.mxu0 0.0
        %1766 = vmatpush1.msra.mxu0 %v355
        %1767 = vmatprep.subr.mxu0 0.0
        %1768 = vmatpush1.msra.mxu0 %v354
        %1769 = vmatprep.subr.mxu0 0.0
        %1770 = vmatpush1.msra.mxu0 %v353
        %1771 = vmatprep.subr.mxu0 0.0
        %1772 = vmatpush1.msra.mxu0 %v352
        %1773 = vmatprep.subr.mxu0 0.0
        %1774 = vmatpush1.msra.mxu0 %v351
        %1775 = vmatprep.subr.mxu0 0.0
        %1776 = vmatpush1.msra.mxu0 %v350
        %1777 = vmatprep.subr.mxu0 0.0
        %1778 = vmatpush1.msra.mxu0 %v349
        %1779 = vmatprep.subr.mxu0 0.0
        %1780 = vmatpush1.msra.mxu0 %v348
        %1781 = vmatprep.subr.mxu0 0.0
        %1782 = vmatpush1.msra.mxu0 %v347
        %1783 = vmatprep.subr.mxu0 0.0
        %1784 = vmatpush1.msra.mxu0 %v346
        %1785 = vmatprep.subr.mxu0 0.0
        %1786 = vmatpush1.msra.mxu0 %v345
        %1787 = vmatprep.subr.mxu0 0.0
        %1788 = vmatpush2.msra.mxu0 0.0
        %1789 = vmatprep.subr.mxu0 0.0
        %1790 = vmatpush2.msra.mxu0 0.0
        %1791 = vmatprep.subr.mxu0 0.0
        %1792 = vmatpush2.msra.mxu0 0.0
        %1793 = vmatprep.subr.mxu0 0.0
        %1794 = vmatpush2.msra.mxu0 0.0
        %1795 = vmatprep.subr.mxu0 0.0
        %1796 = vmatpush2.msra.mxu0 0.0
        %1797 = vmatprep.subr.mxu0 0.0
        %1798 = vmatpush2.msra.mxu0 0.0
        %1799 = vmatprep.subr.mxu0 0.0
        %1800 = vmatpush2.msra.mxu0 0.0
        %1801 = vmatprep.subr.mxu0 0.0
        %1802 = vmatpush2.msra.mxu0 0.0
        %1803 = vmatprep.subr.mxu0 0.0
        %1804 = vmatpush2.msra.mxu0 0.0
        %1805 = vmatprep.subr.mxu0 0.0
        %1806 = vmatpush2.msra.mxu0 0.0
        %1807 = vmatprep.subr.mxu0 0.0
        %1808 = vmatpush2.msra.mxu0 0.0
        %1809 = vmatprep.subr.mxu0 0.0
        %1810 = vmatpush2.msra.mxu0 0.0
        %1811 = vmatprep.subr.mxu0 0.0
        %1812 = vmatpush2.msra.mxu0 0.0
        %1813 = vmatprep.subr.mxu0 0.0
        %1814 = vmatpush2.msra.mxu0 0.0
        %1815 = vmatprep.subr.mxu0 0.0
        %1816 = vmatpush2.msra.mxu0 0.0
        %1817 = vmatprep.subr.mxu0 0.0
        %1818 = vmatpush2.msra.mxu0 0.0
        %1819 = vmatprep.mubr.f32.mxu0 0.0
        %1820 = vmatmul.mubr.f32.gmra.mxu0 %v1753
        %v1821 = vpop.f32.mrf.mxu0
        %v1822 = vadd.f32 1e-30, %v1821
        %v1823 = vpop.f32.mrf.mxu0
        %1824 = vmatprep.mubr.f32.mxu0 0.0
        %1825 = vmatmul.mubr.f32.gmra.mxu0 %v1754
        %v1826 = vpop.f32.mrf.mxu0
        %v1827 = vadd.f32 1e-30, %v1826
        %v1828 = vpop.f32.mrf.mxu0
        %1829 = vdwg.mxu0
        %v1830 = vrcp.pop %v1822
        %v1831 = vrcp.pop %v1827
        %v1832 = vmul.f32 %v326, %v1830
        %v1833 = vmul.f32 %v327, %v1831
        %v1834 = vmul.f32 %v565, %v1832
        %v1835 = vmul.f32 %v566, %v1833
        %v1836 = vadd.f32 %v1834, %v1835
        %v1837 = vrot.slane %v1836, 4
        %v1838 = vadd.f32 %v1836, %v1837
        %v1839 = vrot.slane %v1838, 2
        %v1840 = vadd.f32 %v1838, %v1839
        %v1841 = vrot.slane %v1840, 1
        %v1842 = vadd.f32 %v1840, %v1841
        %v1843 = vadd.f32 %v1842, 1e-30
        %v1844 = vrcp.pop %v1843
        %v1845 = vmul.f32 %v328, %v1844
        %v1847 = vlaneseq
        %v1848 = vshrl.u32 %v1847, 7
        %v1849 = vsub.s32 0, %v1848
        %v1850 = vrot.slane %v1845, %v1849
        %v1852 = vmul.f32 %v565, %v1850
        %v1853 = vmul.f32 %v566, %v1850
        %1854 = vmatprep.subr.mxu0 0.0
        %1855 = vmatpush1.msra.mxu0 %v360
        %1856 = vmatprep.subr.mxu0 0.0
        %1857 = vmatpush1.msra.mxu0 %v359
        %1858 = vmatprep.subr.mxu0 0.0
        %1859 = vmatpush1.msra.mxu0 %v358
        %1860 = vmatprep.subr.mxu0 0.0
        %1861 = vmatpush1.msra.mxu0 %v357
        %1862 = vmatprep.subr.mxu0 0.0
        %1863 = vmatpush1.msra.mxu0 %v356
        %1864 = vmatprep.subr.mxu0 0.0
        %1865 = vmatpush1.msra.mxu0 %v355
        %1866 = vmatprep.subr.mxu0 0.0
        %1867 = vmatpush1.msra.mxu0 %v354
        %1868 = vmatprep.subr.mxu0 0.0
        %1869 = vmatpush1.msra.mxu0 %v353
        %1870 = vmatprep.subr.mxu0 0.0
        %1871 = vmatpush1.msra.mxu0 %v352
        %1872 = vmatprep.subr.mxu0 0.0
        %1873 = vmatpush1.msra.mxu0 %v351
        %1874 = vmatprep.subr.mxu0 0.0
        %1875 = vmatpush1.msra.mxu0 %v350
        %1876 = vmatprep.subr.mxu0 0.0
        %1877 = vmatpush1.msra.mxu0 %v349
        %1878 = vmatprep.subr.mxu0 0.0
        %1879 = vmatpush1.msra.mxu0 %v348
        %1880 = vmatprep.subr.mxu0 0.0
        %1881 = vmatpush1.msra.mxu0 %v347
        %1882 = vmatprep.subr.mxu0 0.0
        %1883 = vmatpush1.msra.mxu0 %v346
        %1884 = vmatprep.subr.mxu0 0.0
        %1885 = vmatpush1.msra.mxu0 %v345
        %1886 = vmatprep.subr.mxu0 0.0
        %1887 = vmatpush2.msra.mxu0 0.0
        %1888 = vmatprep.subr.mxu0 0.0
        %1889 = vmatpush2.msra.mxu0 0.0
        %1890 = vmatprep.subr.mxu0 0.0
        %1891 = vmatpush2.msra.mxu0 0.0
        %1892 = vmatprep.subr.mxu0 0.0
        %1893 = vmatpush2.msra.mxu0 0.0
        %1894 = vmatprep.subr.mxu0 0.0
        %1895 = vmatpush2.msra.mxu0 0.0
        %1896 = vmatprep.subr.mxu0 0.0
        %1897 = vmatpush2.msra.mxu0 0.0
        %1898 = vmatprep.subr.mxu0 0.0
        %1899 = vmatpush2.msra.mxu0 0.0
        %1900 = vmatprep.subr.mxu0 0.0
        %1901 = vmatpush2.msra.mxu0 0.0
        %1902 = vmatprep.subr.mxu0 0.0
        %1903 = vmatpush2.msra.mxu0 0.0
        %1904 = vmatprep.subr.mxu0 0.0
        %1905 = vmatpush2.msra.mxu0 0.0
        %1906 = vmatprep.subr.mxu0 0.0
        %1907 = vmatpush2.msra.mxu0 0.0
        %1908 = vmatprep.subr.mxu0 0.0
        %1909 = vmatpush2.msra.mxu0 0.0
        %1910 = vmatprep.subr.mxu0 0.0
        %1911 = vmatpush2.msra.mxu0 0.0
        %1912 = vmatprep.subr.mxu0 0.0
        %1913 = vmatpush2.msra.mxu0 0.0
        %1914 = vmatprep.subr.mxu0 0.0
        %1915 = vmatpush2.msra.mxu0 0.0
        %1916 = vmatprep.subr.mxu0 0.0
        %1917 = vmatpush2.msra.mxu0 0.0
        %1918 = vmatprep.mubr.f32.mxu0 0.0
        %1919 = vmatmul.mubr.f32.gmra.mxu0 %v1852
        %v1920 = vpop.f32.mrf.mxu0
        %v1921 = vadd.f32 1e-30, %v1920
        %v1922 = vpop.f32.mrf.mxu0
        %1923 = vmatprep.mubr.f32.mxu0 0.0
        %1924 = vmatmul.mubr.f32.gmra.mxu0 %v1853
        %v1925 = vpop.f32.mrf.mxu0
        %v1926 = vadd.f32 1e-30, %v1925
        %v1927 = vpop.f32.mrf.mxu0
        %1928 = vdwg.mxu0
        %v1929 = vrcp.pop %v1921
        %v1930 = vrcp.pop %v1926
        %v1931 = vmul.f32 %v326, %v1929
        %v1932 = vmul.f32 %v327, %v1930
        %v1933 = vmul.f32 %v565, %v1931
        %v1934 = vmul.f32 %v566, %v1932
        %v1935 = vadd.f32 %v1933, %v1934
        %v1936 = vrot.slane %v1935, 4
        %v1937 = vadd.f32 %v1935, %v1936
        %v1938 = vrot.slane %v1937, 2
        %v1939 = vadd.f32 %v1937, %v1938
        %v1940 = vrot.slane %v1939, 1
        %v1941 = vadd.f32 %v1939, %v1940
        %v1942 = vadd.f32 %v1941, 1e-30
        %v1943 = vrcp.pop %v1942
        %v1944 = vmul.f32 %v328, %v1943
        %v1946 = vlaneseq
        %v1947 = vshrl.u32 %v1946, 7
        %v1948 = vsub.s32 0, %v1947
        %v1949 = vrot.slane %v1944, %v1948
        %v1951 = vmul.f32 %v565, %v1949
        %v1952 = vmul.f32 %v566, %v1949
        %1953 = vmatprep.subr.mxu0 0.0
        %1954 = vmatpush1.msra.mxu0 %v360
        %1955 = vmatprep.subr.mxu0 0.0
        %1956 = vmatpush1.msra.mxu0 %v359
        %1957 = vmatprep.subr.mxu0 0.0
        %1958 = vmatpush1.msra.mxu0 %v358
        %1959 = vmatprep.subr.mxu0 0.0
        %1960 = vmatpush1.msra.mxu0 %v357
        %1961 = vmatprep.subr.mxu0 0.0
        %1962 = vmatpush1.msra.mxu0 %v356
        %1963 = vmatprep.subr.mxu0 0.0
        %1964 = vmatpush1.msra.mxu0 %v355
        %1965 = vmatprep.subr.mxu0 0.0
        %1966 = vmatpush1.msra.mxu0 %v354
        %1967 = vmatprep.subr.mxu0 0.0
        %1968 = vmatpush1.msra.mxu0 %v353
        %1969 = vmatprep.subr.mxu0 0.0
        %1970 = vmatpush1.msra.mxu0 %v352
        %1971 = vmatprep.subr.mxu0 0.0
        %1972 = vmatpush1.msra.mxu0 %v351
        %1973 = vmatprep.subr.mxu0 0.0
        %1974 = vmatpush1.msra.mxu0 %v350
        %1975 = vmatprep.subr.mxu0 0.0
        %1976 = vmatpush1.msra.mxu0 %v349
        %1977 = vmatprep.subr.mxu0 0.0
        %1978 = vmatpush1.msra.mxu0 %v348
        %1979 = vmatprep.subr.mxu0 0.0
        %1980 = vmatpush1.msra.mxu0 %v347
        %1981 = vmatprep.subr.mxu0 0.0
        %1982 = vmatpush1.msra.mxu0 %v346
        %1983 = vmatprep.subr.mxu0 0.0
        %1984 = vmatpush1.msra.mxu0 %v345
        %1985 = vmatprep.subr.mxu0 0.0
        %1986 = vmatpush2.msra.mxu0 0.0
        %1987 = vmatprep.subr.mxu0 0.0
        %1988 = vmatpush2.msra.mxu0 0.0
        %1989 = vmatprep.subr.mxu0 0.0
        %1990 = vmatpush2.msra.mxu0 0.0
        %1991 = vmatprep.subr.mxu0 0.0
        %1992 = vmatpush2.msra.mxu0 0.0
        %1993 = vmatprep.subr.mxu0 0.0
        %1994 = vmatpush2.msra.mxu0 0.0
        %1995 = vmatprep.subr.mxu0 0.0
        %1996 = vmatpush2.msra.mxu0 0.0
        %1997 = vmatprep.subr.mxu0 0.0
        %1998 = vmatpush2.msra.mxu0 0.0
        %1999 = vmatprep.subr.mxu0 0.0
        %2000 = vmatpush2.msra.mxu0 0.0
        %2001 = vmatprep.subr.mxu0 0.0
        %2002 = vmatpush2.msra.mxu0 0.0
        %2003 = vmatprep.subr.mxu0 0.0
        %2004 = vmatpush2.msra.mxu0 0.0
        %2005 = vmatprep.subr.mxu0 0.0
        %2006 = vmatpush2.msra.mxu0 0.0
        %2007 = vmatprep.subr.mxu0 0.0
        %2008 = vmatpush2.msra.mxu0 0.0
        %2009 = vmatprep.subr.mxu0 0.0
        %2010 = vmatpush2.msra.mxu0 0.0
        %2011 = vmatprep.subr.mxu0 0.0
        %2012 = vmatpush2.msra.mxu0 0.0
        %2013 = vmatprep.subr.mxu0 0.0
        %2014 = vmatpush2.msra.mxu0 0.0
        %2015 = vmatprep.subr.mxu0 0.0
        %2016 = vmatpush2.msra.mxu0 0.0
        %2017 = vmatprep.mubr.f32.mxu0 0.0
        %2018 = vmatmul.mubr.f32.gmra.mxu0 %v1951
        %v2019 = vpop.f32.mrf.mxu0
        %v2020 = vadd.f32 1e-30, %v2019
        %v2021 = vpop.f32.mrf.mxu0
        %2022 = vmatprep.mubr.f32.mxu0 0.0
        %2023 = vmatmul.mubr.f32.gmra.mxu0 %v1952
        %v2024 = vpop.f32.mrf.mxu0
        %v2025 = vadd.f32 1e-30, %v2024
        %v2026 = vpop.f32.mrf.mxu0
        %2027 = vdwg.mxu0
        %v2028 = vrcp.pop %v2020
        %v2029 = vmul.f32 %v326, %v2028
        %v2030 = vrcp.pop %v2025
        %v2031 = vmul.f32 %v327, %v2030
        %v2032 = vmul.f32 %v565, %v2029
        %v2033 = vmul.f32 %v566, %v2031
        %v2034 = vadd.f32 %v2032, %v2033
        %v2035 = vrot.slane %v2034, 4
        %v2036 = vadd.f32 %v2034, %v2035
        %v2037 = vrot.slane %v2036, 2
        %v2038 = vadd.f32 %v2036, %v2037
        %v2039 = vrot.slane %v2038, 1
        %v2040 = vadd.f32 %v2038, %v2039
        %v2041 = vadd.f32 %v2040, 1e-30
        %v2042 = vrcp.pop %v2041
        %v2043 = vmul.f32 %v328, %v2042
        %v2045 = vlaneseq
        %v2046 = vshrl.u32 %v2045, 7
        %v2047 = vsub.s32 0, %v2046
        %v2048 = vrot.slane %v2043, %v2047
        %v2050 = vmul.f32 %v2032, %v2048
        %v2051 = vmul.f32 %v2033, %v2048
      $region49: #{gromov_wasserstein.1} parent=43 // loop_footer
        %s342 = sadd.s32 1, %s338
      $region50: #{gromov_wasserstein.1} parent=43 // loop_footer_branch
        %337 = sbr.rel target = $region46
      $region51: #{gromov_wasserstein.1} parent=43 // loop_exit
        _
      %2052 = vst [vmem:[%s325] sm:$0xff] %v343
      %2053 = vst [vmem:[%s325 + $0x8] sm:$0xff] %v344
      %p2054 = scmp.lt.s32.totalorder %s17, 1
      %s2055 = scalar_select %p2054, %s17, 1
      %s2056 = smul.addr %s2055, 2
      %s2057 = smul.addr %s2056, 8
      %s2058 = scalar_lea.vmem %s6, %s2057
      // Predicated region
      $region52: #{gromov_wasserstein.1} parent=43 // pred_check
        %p2059 = pneg %p186
      $region53: #{gromov_wasserstein.1} parent=43 // pred_check_branch
        %2061 = sbr.rel (%p2059) target = $region55
      $region54: #{gromov_wasserstein.1} parent=43 // pred_region
        _
      $region55: #{gromov_wasserstein.1} parent=43 // pred_fallthru
        _
    $region44: #{gromov_wasserstein.1} parent=5 // pred_fallthru
      _
    %p2062 = scmp.le.s32.totalorder 2, %s12
    // Predicated region
    $region56: #{gromov_wasserstein.1} parent=5 // pred_check
      %p2063 = pneg %p2062
    $region57: #{gromov_wasserstein.1} parent=5 // pred_check_branch
      %2065 = sbr.rel (%p2063) target = $region59
    $region58: #{gromov_wasserstein.1} parent=5 // pred_region
      %s2066 = ssub.s32 %s12, 2
      // Predicated region
      $region60: #{gromov_wasserstein.1} parent=58 // pred_check
        %p2067 = pneg %p192
      $region61: #{gromov_wasserstein.1} parent=58 // pred_check_branch
        %2069 = sbr.rel (%p2067) target = $region63
      $region62: #{gromov_wasserstein.1} parent=58 // pred_region
        %p2070 = scmp.lt.s32.totalorder %s18, 1
        %s2071 = scalar_select %p2070, %s18, 1
        %s2072 = smul.addr %s2071, 2
        %s2073 = smul.addr %s2072, 8
        %s2074 = scalar_lea.vmem %s6, %s2073
      $region63: #{gromov_wasserstein.1} parent=58 // pred_fallthru
        _
    $region59: #{gromov_wasserstein.1} parent=5 // pred_fallthru
      _
  $region6: #{gromov_wasserstein.1} parent=0 // loop_footer
    %s16 = sadd.s32 1, %s12
  $region7: #{gromov_wasserstein.1} parent=0 // loop_footer_branch
    %11 = sbr.rel target = $region3
  $region8: #{gromov_wasserstein.1} parent=0 // loop_exit
    _

</llo_original>
